<compile_context>
chip_gen: v7x
topology: tpu7x:2x2x1
jax: 0.10.0
libtpu: 0.0.40
codegen_flags: <defaults>
</compile_context>

<pallas_src>
import math

import jax
import jax.numpy as jnp
from jax.experimental import pallas as pl
from jax.experimental.pallas import tpu as pltpu

EPS = 1e-5  # nn.LayerNorm default eps


def dp_kernel(x_ref, mp_ref, mn_ref,
              w1_ref, b1_ref, g1_ref, be1_ref,
              w2_ref, b2_ref, g2_ref, be2_ref,
              wl_ref, bl_ref, out_ref):
    rows = x_ref.shape[0]          # block_rows (a whole number of sequences)
    m_prev = mp_ref[...]           # (rows, 1) f32: 1.0 where t-1 is in-sequence
    m_next = mn_ref[...]           # (rows, 1) f32: 1.0 where t+1 is in-sequence

    def conv3(h32, w_ref, b_ref):
        # 1D conv, kernel=3, padding=1 along rows: three accumulated bf16 MXU
        # dots into one f32 accumulator (no (rows, 3C) concat materialization).
        h_c = h32.astype(jnp.bfloat16)                                     # h[t]
        h_p = (m_prev * pltpu.roll(h32, 1, axis=0)).astype(jnp.bfloat16)   # h[t-1]
        h_n = (m_next * pltpu.roll(h32, rows - 1, axis=0)).astype(jnp.bfloat16)  # h[t+1]
        acc = jnp.dot(h_p, w_ref[0], preferred_element_type=jnp.float32)
        acc += jnp.dot(h_c, w_ref[1], preferred_element_type=jnp.float32)
        acc += jnp.dot(h_n, w_ref[2], preferred_element_type=jnp.float32)
        return acc + b_ref[...]

    def layer_norm(h, g_ref, b_ref):
        mu = jnp.mean(h, axis=-1, keepdims=True)
        d = h - mu
        var = jnp.mean(d * d, axis=-1, keepdims=True)
        return d * jax.lax.rsqrt(var + EPS) * g_ref[...] + b_ref[...]

    x32 = x_ref[...].astype(jnp.float32)
    # conv1d_1 -> layer_norm_1 -> relu_1 (dropout = identity in eval)
    h = jnp.maximum(layer_norm(conv3(x32, w1_ref, b1_ref), g1_ref, be1_ref), 0.0)
    # conv1d_2 -> layer_norm_2 -> relu_2
    h = jnp.maximum(layer_norm(conv3(h, w2_ref, b2_ref), g2_ref, be2_ref), 0.0)

    # linear_layer (F -> 1) + relu: reduce first (rows, 1), then relayout only
    # that column into the lane-dense (1, rows) output row.
    y = jnp.sum(h * wl_ref[...], axis=-1, keepdims=True) + bl_ref[...]   # (rows, 1)
    out_ref[...] = jnp.maximum(jnp.transpose(y), 0.0)                    # (1, rows)


def _pick_block_rows(n_rows, seq_len, target_rows=1024):
    """Largest row block that (a) holds whole sequences, (b) is 128-lane
    aligned for the (1, N) output tiling, (c) divides N, (d) stays near the
    target; prefers >=2 blocks so v7x's 2 TCs can split the grid."""
    lcm = seq_len * 128 // math.gcd(seq_len, 128)
    candidates = [r for r in range(lcm, n_rows + 1, lcm) if n_rows % r == 0]
    if not candidates:
        return n_rows                     # single full block (toy / ragged sizes)
    target = min(target_rows, max(n_rows // 2, lcm))
    under = [r for r in candidates if r <= target]
    return max(under) if under else min(candidates)


def duration_predictor(x, params):
    B, T, E = x.shape
    F = params["w1"].shape[2]
    N = B * T
    block_rows = _pick_block_rows(N, T)
    grid = (N // block_rows,)

    # Streamed input in bf16 (halves HBM traffic; MXU-native on all gens).
    x2d = x.reshape(N, E).astype(jnp.bfloat16)

    # Sequence-boundary masks for the shifted conv taps (hoisted out of kernel).
    pos = jnp.arange(N, dtype=jnp.int32) % T
    m_prev = (pos != 0).astype(jnp.float32).reshape(N, 1)
    m_next = (pos != T - 1).astype(jnp.float32).reshape(N, 1)

    # Conv weights kept as (K=3, Cin, Cout) bf16 slabs (one per tap).
    w1 = params["w1"].astype(jnp.bfloat16)
    w2 = params["w2"].astype(jnp.bfloat16)
    wl_row = params["wl"].reshape(1, F)   # f32: used on the VPU, not the MXU

    def stream(shape):
        # row-blocked arrays: block i along the leading (row) axis
        return pl.BlockSpec(shape, lambda i: (i,) + (0,) * (len(shape) - 1))

    def resident(shape):
        # weights / biases: same block every step -> stays VMEM-resident
        nd = len(shape)
        return pl.BlockSpec(shape, lambda i, _nd=nd: (0,) * _nd)

    out = pl.pallas_call(
        dp_kernel,
        out_shape=jax.ShapeDtypeStruct((1, N), jnp.float32),
        grid_spec=pltpu.PrefetchScalarGridSpec(
            num_scalar_prefetch=0,
            grid=grid,
            in_specs=[
                stream((block_rows, E)),
                stream((block_rows, 1)),
                stream((block_rows, 1)),
                resident((3, E, F)), resident((1, F)), resident((1, F)), resident((1, F)),
                resident((3, F, F)), resident((1, F)), resident((1, F)), resident((1, F)),
                resident((1, F)), resident((1, 1)),
            ],
            out_specs=pl.BlockSpec((1, block_rows), lambda i: (0, i)),
        ),
        compiler_params=pltpu.CompilerParams(
            dimension_semantics=("parallel",),        # 2-TC split on v7x; free elsewhere
            vmem_limit_bytes=32 * 1024 * 1024,        # within budget on v5e/v6e/v7x
        ),
    )(x2d, m_prev, m_next,
      w1, params["b1"], params["g1"], params["be1"],
      w2, params["b2"], params["g2"], params["be2"],
      wl_row, params["bl"])

    # Reproduce torch eval-mode tail: out.squeeze() then out.unsqueeze(0).
    y = out.reshape(B, T, 1)
    return jnp.squeeze(y)[None, ...]  # (1, B, T) for B, T > 1


# ---------------- parameter init (deterministic, synthetic) ----------------
def xavier_uniform(key, shape, fan_in, fan_out, gain=1.0):
    limit = gain * (6.0 / (fan_in + fan_out)) ** 0.5
    return jax.random.uniform(key, shape, jnp.float32, -limit, limit)


def make_params(key, encoder_dim, filter_size, kernel=3):
    assert kernel == 3  # TODO(synk): kernel assumed 3 (matches padding=1) as in FastSpeech configs
    ks = jax.random.split(key, 6)
    E, F = encoder_dim, filter_size
    return {
        # conv weights stored as (K, Cin, Cout)
        "w1": xavier_uniform(ks[0], (3, E, F), fan_in=E * 3, fan_out=F * 3),
        "b1": jax.random.uniform(ks[1], (1, F), jnp.float32, -0.1, 0.1),
        "g1": jnp.ones((1, F), jnp.float32),
        "be1": jnp.zeros((1, F), jnp.float32),
        "w2": xavier_uniform(ks[2], (3, F, F), fan_in=F * 3, fan_out=F * 3),
        "b2": jax.random.uniform(ks[3], (1, F), jnp.float32, -0.1, 0.1),
        "g2": jnp.ones((1, F), jnp.float32),
        "be2": jnp.zeros((1, F), jnp.float32),
        # linear weight stored as (F, 1)
        "wl": xavier_uniform(ks[4], (F, 1), fan_in=F, fan_out=1),
        "bl": jax.random.uniform(ks[5], (1, 1), jnp.float32, -0.1, 0.1),
    }


# ---------------- pure-JAX f32 reference for validation ----------------
def ref_forward(x, p):
    def conv(h, w, b):
        hp = jnp.pad(h, ((0, 0), (1, 1), (0, 0)))
        return (jnp.einsum("btc,cf->btf", hp[:, 0:-2], w[0]) +
                jnp.einsum("btc,cf->btf", hp[:, 1:-1], w[1]) +
                jnp.einsum("btc,cf->btf", hp[:, 2:], w[2]) + b)

    def ln(h, g, b):
        mu = jnp.mean(h, axis=-1, keepdims=True)
        var = jnp.mean((h - mu) ** 2, axis=-1, keepdims=True)
        return (h - mu) / jnp.sqrt(var + EPS) * g + b

    h = jnp.maximum(ln(conv(x, p["w1"], p["b1"]), p["g1"], p["be1"]), 0.0)
    h = jnp.maximum(ln(conv(h, p["w2"], p["b2"]), p["g2"], p["be2"]), 0.0)
    y = jnp.maximum(h @ p["wl"] + p["bl"], 0.0)  # (B, T, 1)
    return jnp.squeeze(y)[None, ...]


if __name__ == "__main__":
    # config: encoder_dim=32, duration_predictor_filter_size=32, kernel=3, dropout (unused in eval)
    B, T, E, F = 4, 64, 32, 32   # N = 256 rows -> 2 row blocks of 128 (2 sequences each)
    key = jax.random.PRNGKey(0)
    kx, kp = jax.random.split(key)
    x = jax.random.normal(kx, (B, T, E), jnp.float32)
    params = make_params(kp, E, F, kernel=3)

    out = jax.block_until_ready(duration_predictor(x, params))
    assert out.shape == (1, B, T), out.shape

    ref = ref_forward(x, params)
    # bf16 matmul inputs -> tolerance looser than a pure-f32 comparison.
    err = float(jnp.max(jnp.abs(out - ref)))
    assert jnp.allclose(out, ref, atol=1e-1, rtol=1e-1), err

    print("KERNEL_OK")
</pallas_src>

<mosaic_0001>
module attributes {stable_mosaic.version = 11 : i64} {
  func.func @dp_kernel(%arg0: i32, %arg1: memref<128x32xbf16, #tpu.memory_space<vmem>>, %arg2: memref<128x1xf32, #tpu.memory_space<vmem>>, %arg3: memref<128x1xf32, #tpu.memory_space<vmem>>, %arg4: memref<3x32x32xbf16, #tpu.memory_space<vmem>>, %arg5: memref<1x32xf32, #tpu.memory_space<vmem>>, %arg6: memref<1x32xf32, #tpu.memory_space<vmem>>, %arg7: memref<1x32xf32, #tpu.memory_space<vmem>>, %arg8: memref<3x32x32xbf16, #tpu.memory_space<vmem>>, %arg9: memref<1x32xf32, #tpu.memory_space<vmem>>, %arg10: memref<1x32xf32, #tpu.memory_space<vmem>>, %arg11: memref<1x32xf32, #tpu.memory_space<vmem>>, %arg12: memref<1x32xf32, #tpu.memory_space<vmem>>, %arg13: memref<1x1xf32, #tpu.memory_space<vmem>>, %arg14: memref<1x128xf32, #tpu.memory_space<vmem>>) attributes {dimension_semantics = [#tpu.dimension_semantics<parallel>], iteration_bounds = array<i64: 2>, scalar_prefetch = 0 : i64, scratch_operands = 0 : i64, tpu.core_type = #tpu.core_type<tc>, window_params = [{transform_indices = @transform_0, window_bounds = array<i64: 128, 32>}, {transform_indices = @transform_1, window_bounds = array<i64: 128, 1>}, {transform_indices = @transform_2, window_bounds = array<i64: 128, 1>}, {pipeline_mode = #tpu.pipeline_mode<synchronous>, transform_indices = @transform_3, window_bounds = array<i64: 3, 32, 32>}, {pipeline_mode = #tpu.pipeline_mode<synchronous>, transform_indices = @transform_4, window_bounds = array<i64: 1, 32>}, {pipeline_mode = #tpu.pipeline_mode<synchronous>, transform_indices = @transform_5, window_bounds = array<i64: 1, 32>}, {pipeline_mode = #tpu.pipeline_mode<synchronous>, transform_indices = @transform_6, window_bounds = array<i64: 1, 32>}, {pipeline_mode = #tpu.pipeline_mode<synchronous>, transform_indices = @transform_7, window_bounds = array<i64: 3, 32, 32>}, {pipeline_mode = #tpu.pipeline_mode<synchronous>, transform_indices = @transform_8, window_bounds = array<i64: 1, 32>}, {pipeline_mode = #tpu.pipeline_mode<synchronous>, transform_indices = @transform_9, window_bounds = array<i64: 1, 32>}, {pipeline_mode = #tpu.pipeline_mode<synchronous>, transform_indices = @transform_10, window_bounds = array<i64: 1, 32>}, {pipeline_mode = #tpu.pipeline_mode<synchronous>, transform_indices = @transform_11, window_bounds = array<i64: 1, 32>}, {pipeline_mode = #tpu.pipeline_mode<synchronous>, transform_indices = @transform_12, window_bounds = array<i64: 1, 1>}, {transform_indices = @transform_13, window_bounds = array<i64: 1, 128>}]} {
    %c0 = arith.constant 0 : index
    %c0_0 = arith.constant 0 : index
    %0 = vector.load %arg2[%c0, %c0_0] : memref<128x1xf32, #tpu.memory_space<vmem>>, vector<128x1xf32>
    %c0_1 = arith.constant 0 : index
    %c0_2 = arith.constant 0 : index
    %1 = vector.load %arg3[%c0_1, %c0_2] : memref<128x1xf32, #tpu.memory_space<vmem>>, vector<128x1xf32>
    %c0_3 = arith.constant 0 : index
    %c0_4 = arith.constant 0 : index
    %2 = vector.load %arg1[%c0_3, %c0_4] : memref<128x32xbf16, #tpu.memory_space<vmem>>, vector<128x32xbf16>
    %3 = arith.extf %2 : vector<128x32xbf16> to vector<128x32xf32>
    %4 = arith.truncf %3 : vector<128x32xf32> to vector<128x32xbf16>
    %c1_i32 = arith.constant 1 : i32
    %5 = tpu.dynamic_rotate %3 by %c1_i32 dim 0 : vector<128x32xf32>, i32 -> vector<128x32xf32>
    %6 = vector.broadcast %0 : vector<128x1xf32> to vector<128x32xf32>
    %7 = arith.mulf %6, %5 : vector<128x32xf32>
    %8 = arith.truncf %7 : vector<128x32xf32> to vector<128x32xbf16>
    %c127_i32 = arith.constant 127 : i32
    %9 = tpu.dynamic_rotate %3 by %c127_i32 dim 0 : vector<128x32xf32>, i32 -> vector<128x32xf32>
    %10 = vector.broadcast %1 : vector<128x1xf32> to vector<128x32xf32>
    %11 = arith.mulf %10, %9 : vector<128x32xf32>
    %12 = arith.truncf %11 : vector<128x32xf32> to vector<128x32xbf16>
    %c0_5 = arith.constant 0 : index
    %c0_6 = arith.constant 0 : index
    %c0_7 = arith.constant 0 : index
    %13 = vector.load %arg4[%c0_5, %c0_6, %c0_7] : memref<3x32x32xbf16, #tpu.memory_space<vmem>>, vector<1x32x32xbf16>
    %14 = vector.shape_cast %13 : vector<1x32x32xbf16> to vector<32x32xbf16>
    %cst = arith.constant dense<0.000000e+00> : vector<128x32xf32>
    %15 = tpu.matmul %8, %14, %cst {dimension_numbers = #tpu.dot_dimension_numbers<[1], [0], [0], [1], [0, 0, 1, 1], [], []>} : vector<128x32xbf16>, vector<32x32xbf16>, vector<128x32xf32> -> vector<128x32xf32>
    %c1 = arith.constant 1 : index
    %c0_8 = arith.constant 0 : index
    %c0_9 = arith.constant 0 : index
    %16 = vector.load %arg4[%c1, %c0_8, %c0_9] : memref<3x32x32xbf16, #tpu.memory_space<vmem>>, vector<1x32x32xbf16>
    %17 = vector.shape_cast %16 : vector<1x32x32xbf16> to vector<32x32xbf16>
    %cst_10 = arith.constant dense<0.000000e+00> : vector<128x32xf32>
    %18 = tpu.matmul %4, %17, %cst_10 {dimension_numbers = #tpu.dot_dimension_numbers<[1], [0], [0], [1], [0, 0, 1, 1], [], []>} : vector<128x32xbf16>, vector<32x32xbf16>, vector<128x32xf32> -> vector<128x32xf32>
    %19 = arith.addf %15, %18 : vector<128x32xf32>
    %c2 = arith.constant 2 : index
    %c0_11 = arith.constant 0 : index
    %c0_12 = arith.constant 0 : index
    %20 = vector.load %arg4[%c2, %c0_11, %c0_12] : memref<3x32x32xbf16, #tpu.memory_space<vmem>>, vector<1x32x32xbf16>
    %21 = vector.shape_cast %20 : vector<1x32x32xbf16> to vector<32x32xbf16>
    %cst_13 = arith.constant dense<0.000000e+00> : vector<128x32xf32>
    %22 = tpu.matmul %12, %21, %cst_13 {dimension_numbers = #tpu.dot_dimension_numbers<[1], [0], [0], [1], [0, 0, 1, 1], [], []>} : vector<128x32xbf16>, vector<32x32xbf16>, vector<128x32xf32> -> vector<128x32xf32>
    %23 = arith.addf %19, %22 : vector<128x32xf32>
    %c0_14 = arith.constant 0 : index
    %c0_15 = arith.constant 0 : index
    %24 = vector.load %arg5[%c0_14, %c0_15] : memref<1x32xf32, #tpu.memory_space<vmem>>, vector<1x32xf32>
    %25 = vector.broadcast %24 : vector<1x32xf32> to vector<128x32xf32>
    %26 = arith.addf %23, %25 : vector<128x32xf32>
    %cst_16 = arith.constant dense<0.000000e+00> : vector<128xf32>
    %27 = vector.multi_reduction <add>, %26, %cst_16 [1] : vector<128x32xf32> to vector<128xf32>
    %28 = vector.shape_cast %27 : vector<128xf32> to vector<128x1xf32>
    %cst_17 = arith.constant 3.200000e+01 : f32
    %29 = vector.broadcast %cst_17 : f32 to vector<128x1xf32>
    %30 = arith.divf %28, %29 : vector<128x1xf32>
    %31 = vector.broadcast %30 : vector<128x1xf32> to vector<128x32xf32>
    %32 = arith.subf %26, %31 : vector<128x32xf32>
    %33 = arith.mulf %32, %32 : vector<128x32xf32>
    %cst_18 = arith.constant dense<0.000000e+00> : vector<128xf32>
    %34 = vector.multi_reduction <add>, %33, %cst_18 [1] : vector<128x32xf32> to vector<128xf32>
    %35 = vector.shape_cast %34 : vector<128xf32> to vector<128x1xf32>
    %cst_19 = arith.constant 3.200000e+01 : f32
    %36 = vector.broadcast %cst_19 : f32 to vector<128x1xf32>
    %37 = arith.divf %35, %36 : vector<128x1xf32>
    %cst_20 = arith.constant 9.99999974E-6 : f32
    %38 = vector.broadcast %cst_20 : f32 to vector<128x1xf32>
    %39 = arith.addf %37, %38 : vector<128x1xf32>
    %40 = math.rsqrt %39 : vector<128x1xf32>
    %41 = vector.broadcast %40 : vector<128x1xf32> to vector<128x32xf32>
    %42 = arith.mulf %32, %41 : vector<128x32xf32>
    %c0_21 = arith.constant 0 : index
    %c0_22 = arith.constant 0 : index
    %43 = vector.load %arg6[%c0_21, %c0_22] : memref<1x32xf32, #tpu.memory_space<vmem>>, vector<1x32xf32>
    %44 = vector.broadcast %43 : vector<1x32xf32> to vector<128x32xf32>
    %45 = arith.mulf %42, %44 : vector<128x32xf32>
    %c0_23 = arith.constant 0 : index
    %c0_24 = arith.constant 0 : index
    %46 = vector.load %arg7[%c0_23, %c0_24] : memref<1x32xf32, #tpu.memory_space<vmem>>, vector<1x32xf32>
    %47 = vector.broadcast %46 : vector<1x32xf32> to vector<128x32xf32>
    %48 = arith.addf %45, %47 : vector<128x32xf32>
    %cst_25 = arith.constant 0.000000e+00 : f32
    %49 = vector.broadcast %cst_25 : f32 to vector<128x32xf32>
    %50 = arith.maximumf %48, %49 : vector<128x32xf32>
    %51 = arith.truncf %50 : vector<128x32xf32> to vector<128x32xbf16>
    %c1_i32_26 = arith.constant 1 : i32
    %52 = tpu.dynamic_rotate %50 by %c1_i32_26 dim 0 : vector<128x32xf32>, i32 -> vector<128x32xf32>
    %53 = vector.broadcast %0 : vector<128x1xf32> to vector<128x32xf32>
    %54 = arith.mulf %53, %52 : vector<128x32xf32>
    %55 = arith.truncf %54 : vector<128x32xf32> to vector<128x32xbf16>
    %c127_i32_27 = arith.constant 127 : i32
    %56 = tpu.dynamic_rotate %50 by %c127_i32_27 dim 0 : vector<128x32xf32>, i32 -> vector<128x32xf32>
    %57 = vector.broadcast %1 : vector<128x1xf32> to vector<128x32xf32>
    %58 = arith.mulf %57, %56 : vector<128x32xf32>
    %59 = arith.truncf %58 : vector<128x32xf32> to vector<128x32xbf16>
    %c0_28 = arith.constant 0 : index
    %c0_29 = arith.constant 0 : index
    %c0_30 = arith.constant 0 : index
    %60 = vector.load %arg8[%c0_28, %c0_29, %c0_30] : memref<3x32x32xbf16, #tpu.memory_space<vmem>>, vector<1x32x32xbf16>
    %61 = vector.shape_cast %60 : vector<1x32x32xbf16> to vector<32x32xbf16>
    %cst_31 = arith.constant dense<0.000000e+00> : vector<128x32xf32>
    %62 = tpu.matmul %55, %61, %cst_31 {dimension_numbers = #tpu.dot_dimension_numbers<[1], [0], [0], [1], [0, 0, 1, 1], [], []>} : vector<128x32xbf16>, vector<32x32xbf16>, vector<128x32xf32> -> vector<128x32xf32>
    %c1_32 = arith.constant 1 : index
    %c0_33 = arith.constant 0 : index
    %c0_34 = arith.constant 0 : index
    %63 = vector.load %arg8[%c1_32, %c0_33, %c0_34] : memref<3x32x32xbf16, #tpu.memory_space<vmem>>, vector<1x32x32xbf16>
    %64 = vector.shape_cast %63 : vector<1x32x32xbf16> to vector<32x32xbf16>
    %cst_35 = arith.constant dense<0.000000e+00> : vector<128x32xf32>
    %65 = tpu.matmul %51, %64, %cst_35 {dimension_numbers = #tpu.dot_dimension_numbers<[1], [0], [0], [1], [0, 0, 1, 1], [], []>} : vector<128x32xbf16>, vector<32x32xbf16>, vector<128x32xf32> -> vector<128x32xf32>
    %66 = arith.addf %62, %65 : vector<128x32xf32>
    %c2_36 = arith.constant 2 : index
    %c0_37 = arith.constant 0 : index
    %c0_38 = arith.constant 0 : index
    %67 = vector.load %arg8[%c2_36, %c0_37, %c0_38] : memref<3x32x32xbf16, #tpu.memory_space<vmem>>, vector<1x32x32xbf16>
    %68 = vector.shape_cast %67 : vector<1x32x32xbf16> to vector<32x32xbf16>
    %cst_39 = arith.constant dense<0.000000e+00> : vector<128x32xf32>
    %69 = tpu.matmul %59, %68, %cst_39 {dimension_numbers = #tpu.dot_dimension_numbers<[1], [0], [0], [1], [0, 0, 1, 1], [], []>} : vector<128x32xbf16>, vector<32x32xbf16>, vector<128x32xf32> -> vector<128x32xf32>
    %70 = arith.addf %66, %69 : vector<128x32xf32>
    %c0_40 = arith.constant 0 : index
    %c0_41 = arith.constant 0 : index
    %71 = vector.load %arg9[%c0_40, %c0_41] : memref<1x32xf32, #tpu.memory_space<vmem>>, vector<1x32xf32>
    %72 = vector.broadcast %71 : vector<1x32xf32> to vector<128x32xf32>
    %73 = arith.addf %70, %72 : vector<128x32xf32>
    %cst_42 = arith.constant dense<0.000000e+00> : vector<128xf32>
    %74 = vector.multi_reduction <add>, %73, %cst_42 [1] : vector<128x32xf32> to vector<128xf32>
    %75 = vector.shape_cast %74 : vector<128xf32> to vector<128x1xf32>
    %cst_43 = arith.constant 3.200000e+01 : f32
    %76 = vector.broadcast %cst_43 : f32 to vector<128x1xf32>
    %77 = arith.divf %75, %76 : vector<128x1xf32>
    %78 = vector.broadcast %77 : vector<128x1xf32> to vector<128x32xf32>
    %79 = arith.subf %73, %78 : vector<128x32xf32>
    %80 = arith.mulf %79, %79 : vector<128x32xf32>
    %cst_44 = arith.constant dense<0.000000e+00> : vector<128xf32>
    %81 = vector.multi_reduction <add>, %80, %cst_44 [1] : vector<128x32xf32> to vector<128xf32>
    %82 = vector.shape_cast %81 : vector<128xf32> to vector<128x1xf32>
    %cst_45 = arith.constant 3.200000e+01 : f32
    %83 = vector.broadcast %cst_45 : f32 to vector<128x1xf32>
    %84 = arith.divf %82, %83 : vector<128x1xf32>
    %cst_46 = arith.constant 9.99999974E-6 : f32
    %85 = vector.broadcast %cst_46 : f32 to vector<128x1xf32>
    %86 = arith.addf %84, %85 : vector<128x1xf32>
    %87 = math.rsqrt %86 : vector<128x1xf32>
    %88 = vector.broadcast %87 : vector<128x1xf32> to vector<128x32xf32>
    %89 = arith.mulf %79, %88 : vector<128x32xf32>
    %c0_47 = arith.constant 0 : index
    %c0_48 = arith.constant 0 : index
    %90 = vector.load %arg10[%c0_47, %c0_48] : memref<1x32xf32, #tpu.memory_space<vmem>>, vector<1x32xf32>
    %91 = vector.broadcast %90 : vector<1x32xf32> to vector<128x32xf32>
    %92 = arith.mulf %89, %91 : vector<128x32xf32>
    %c0_49 = arith.constant 0 : index
    %c0_50 = arith.constant 0 : index
    %93 = vector.load %arg11[%c0_49, %c0_50] : memref<1x32xf32, #tpu.memory_space<vmem>>, vector<1x32xf32>
    %94 = vector.broadcast %93 : vector<1x32xf32> to vector<128x32xf32>
    %95 = arith.addf %92, %94 : vector<128x32xf32>
    %cst_51 = arith.constant 0.000000e+00 : f32
    %96 = vector.broadcast %cst_51 : f32 to vector<128x32xf32>
    %97 = arith.maximumf %95, %96 : vector<128x32xf32>
    %c0_52 = arith.constant 0 : index
    %c0_53 = arith.constant 0 : index
    %98 = vector.load %arg12[%c0_52, %c0_53] : memref<1x32xf32, #tpu.memory_space<vmem>>, vector<1x32xf32>
    %99 = vector.broadcast %98 : vector<1x32xf32> to vector<128x32xf32>
    %100 = arith.mulf %97, %99 : vector<128x32xf32>
    %cst_54 = arith.constant dense<0.000000e+00> : vector<128xf32>
    %101 = vector.multi_reduction <add>, %100, %cst_54 [1] : vector<128x32xf32> to vector<128xf32>
    %102 = vector.shape_cast %101 : vector<128xf32> to vector<128x1xf32>
    %c0_55 = arith.constant 0 : index
    %c0_56 = arith.constant 0 : index
    %103 = vector.load %arg13[%c0_55, %c0_56] : memref<1x1xf32, #tpu.memory_space<vmem>>, vector<1x1xf32>
    %104 = vector.broadcast %103 : vector<1x1xf32> to vector<128x1xf32>
    %105 = arith.addf %102, %104 : vector<128x1xf32>
    %106 = tpu.transpose %105, [1, 0] : vector<128x1xf32> -> vector<1x128xf32>
    %cst_57 = arith.constant 0.000000e+00 : f32
    %107 = vector.broadcast %cst_57 : f32 to vector<1x128xf32>
    %108 = arith.maximumf %106, %107 : vector<1x128xf32>
    %c0_58 = arith.constant 0 : index
    %c0_59 = arith.constant 0 : index
    %109 = vector.load %arg14[%c0_58, %c0_59] : memref<1x128xf32, #tpu.memory_space<vmem>>, vector<1x128xf32>
    tpu.vector_store %arg14[%c0_58, %c0_59], %108 {strides = array<i32>} : memref<1x128xf32, #tpu.memory_space<vmem>>, vector<1x128xf32>,
    return
  }
  func.func @transform_0(%arg0: i32) -> (i32, i32) {
    %c0_i32 = arith.constant 0 : i32
    %c0_i32_0 = arith.constant 0 : i32
    return %arg0, %c0_i32 : i32, i32
  }
  func.func @transform_1(%arg0: i32) -> (i32, i32) {
    %c0_i32 = arith.constant 0 : i32
    %c0_i32_0 = arith.constant 0 : i32
    return %arg0, %c0_i32 : i32, i32
  }
  func.func @transform_2(%arg0: i32) -> (i32, i32) {
    %c0_i32 = arith.constant 0 : i32
    %c0_i32_0 = arith.constant 0 : i32
    return %arg0, %c0_i32 : i32, i32
  }
  func.func @transform_3(%arg0: i32) -> (i32, i32, i32) {
    %c0_i32 = arith.constant 0 : i32
    %c0_i32_0 = arith.constant 0 : i32
    %c0_i32_1 = arith.constant 0 : i32
    %c0_i32_2 = arith.constant 0 : i32
    return %c0_i32, %c0_i32_0, %c0_i32_1 : i32, i32, i32
  }
  func.func @transform_4(%arg0: i32) -> (i32, i32) {
    %c0_i32 = arith.constant 0 : i32
    %c0_i32_0 = arith.constant 0 : i32
    %c0_i32_1 = arith.constant 0 : i32
    return %c0_i32, %c0_i32_0 : i32, i32
  }
  func.func @transform_5(%arg0: i32) -> (i32, i32) {
    %c0_i32 = arith.constant 0 : i32
    %c0_i32_0 = arith.constant 0 : i32
    %c0_i32_1 = arith.constant 0 : i32
    return %c0_i32, %c0_i32_0 : i32, i32
  }
  func.func @transform_6(%arg0: i32) -> (i32, i32) {
    %c0_i32 = arith.constant 0 : i32
    %c0_i32_0 = arith.constant 0 : i32
    %c0_i32_1 = arith.constant 0 : i32
    return %c0_i32, %c0_i32_0 : i32, i32
  }
  func.func @transform_7(%arg0: i32) -> (i32, i32, i32) {
    %c0_i32 = arith.constant 0 : i32
    %c0_i32_0 = arith.constant 0 : i32
    %c0_i32_1 = arith.constant 0 : i32
    %c0_i32_2 = arith.constant 0 : i32
    return %c0_i32, %c0_i32_0, %c0_i32_1 : i32, i32, i32
  }
  func.func @transform_8(%arg0: i32) -> (i32, i32) {
    %c0_i32 = arith.constant 0 : i32
    %c0_i32_0 = arith.constant 0 : i32
    %c0_i32_1 = arith.constant 0 : i32
    return %c0_i32, %c0_i32_0 : i32, i32
  }
  func.func @transform_9(%arg0: i32) -> (i32, i32) {
    %c0_i32 = arith.constant 0 : i32
    %c0_i32_0 = arith.constant 0 : i32
    %c0_i32_1 = arith.constant 0 : i32
    return %c0_i32, %c0_i32_0 : i32, i32
  }
  func.func @transform_10(%arg0: i32) -> (i32, i32) {
    %c0_i32 = arith.constant 0 : i32
    %c0_i32_0 = arith.constant 0 : i32
    %c0_i32_1 = arith.constant 0 : i32
    return %c0_i32, %c0_i32_0 : i32, i32
  }
  func.func @transform_11(%arg0: i32) -> (i32, i32) {
    %c0_i32 = arith.constant 0 : i32
    %c0_i32_0 = arith.constant 0 : i32
    %c0_i32_1 = arith.constant 0 : i32
    return %c0_i32, %c0_i32_0 : i32, i32
  }
  func.func @transform_12(%arg0: i32) -> (i32, i32) {
    %c0_i32 = arith.constant 0 : i32
    %c0_i32_0 = arith.constant 0 : i32
    %c0_i32_1 = arith.constant 0 : i32
    return %c0_i32, %c0_i32_0 : i32, i32
  }
  func.func @transform_13(%arg0: i32) -> (i32, i32) {
    %c0_i32 = arith.constant 0 : i32
    %c0_i32_0 = arith.constant 0 : i32
    return %c0_i32, %arg0 : i32, i32
  }
}

</mosaic_0001>

<llo_original>
// kernel: tpu_custom_call.1
$region0: #{tpu_custom_call.1}
  #allocation0 [shape = 'u32[]', space=smem, size = 0x4, offset = 0x4, fixed_abs, tag = 'smem constant byte address 0x4 - core index']
  #allocation1 [shape = 'u32[144,128]{1,0:T(1,128)}', space=vmem, size = 0x12000, scoped, tag = 'internal scratch']
  #allocation2 [shape = 'f32[1,1]{1,0:T(1,128)S(1)}', space=vmem, size = 0x200, scoped, tag = 'scoped memory for tpu_custom_call.1']
  %s0 = inlined_call_operand.vmem [shape: bf16[256,32], index: 0, kind: input, shape index: {}]
  %s1 = inlined_call_operand.vmem [shape: f32[256,1], index: 1, kind: input, shape index: {}]
  %s2 = inlined_call_operand.vmem [shape: f32[256,1], index: 2, kind: input, shape index: {}]
  %s3 = inlined_call_operand.vmem [shape: bf16[3,32,32], index: 3, kind: input, shape index: {}]
  %s4 = inlined_call_operand.vmem [shape: f32[1,32], index: 4, kind: input, shape index: {}]
  %s5 = inlined_call_operand.vmem [shape: f32[1,32], index: 5, kind: input, shape index: {}]
  %s6 = inlined_call_operand.vmem [shape: f32[1,32], index: 6, kind: input, shape index: {}]
  %s7 = inlined_call_operand.vmem [shape: bf16[3,32,32], index: 7, kind: input, shape index: {}]
  %s8 = inlined_call_operand.vmem [shape: f32[1,32], index: 8, kind: input, shape index: {}]
  %s9 = inlined_call_operand.vmem [shape: f32[1,32], index: 9, kind: input, shape index: {}]
  %s10 = inlined_call_operand.vmem [shape: f32[1,32], index: 10, kind: input, shape index: {}]
  %s11 = inlined_call_operand.vmem [shape: f32[1,32], index: 11, kind: input, shape index: {}]
  %s12 = inlined_call_operand.<no memory space> [shape: f32[1,1], index: 12, kind: input, shape index: {}]
  %s13 = inlined_call_operand.hbm [shape: f32[1,256], index: 13, kind: output, shape index: {}]
  %s14 = sld [smem:[#allocation0]]
  $region85: #{tpu_custom_call.1} parent=0
    _
  %s16 = ssub.s32 1, %s14
  %s17 = scalar_select 0, %s16, %s14
  %v18 = vstv %s12
  %19 = vst [vmem:[#allocation2] sm:$0x1] %v18
  $region1: #{tpu_custom_call.1} parent=0
    #allocation3 [shape = 'u8[1024]{0}', space=vmem, size = 0x400, scoped, tag = 'output window, operand 0']
    #allocation4 [shape = 's32[2]{0}', space=sflag, size = 0x8, scoped, tag = 'scoped memory for tpu_custom_call.1']
    %20 = vsyncpa [#allocation4], 0
    %s21 = scalar_lea.sflag [#allocation4], 1
    %22 = vsyncpa %s21, 0
    loop: start=0, step=1, limit=4
    $region2: #{tpu_custom_call.1} parent=1 // loop_pre_header
      _
    $region3: #{tpu_custom_call.1} parent=1 // loop_header
      %s24 = sphi 0, %s28
      %p25 = scmp.ge.s32.totalorder %s24, 4
      %s34 = sphi 0, %s36
      %s37 = sphi 0, %s34
      %s38 = sphi 0, %s37
      %s54 = sphi 0, %s38
      %s60 = sphi 0, %s62
      %s63 = sphi 0, %s60
      %s64 = sphi 0, %s63
      %s80 = sphi 0, %s64
      %s86 = sphi 0, %s88
      %s89 = sphi 0, %s86
      %s90 = sphi 0, %s89
      %s106 = sphi 0, %s90
      %s110 = sphi 0, %s110
      %s112 = sphi 0, %s110
      %s113 = sphi 0, %s112
      %s127 = sphi 0, %s113
      %s131 = sphi 0, %s131
      %s133 = sphi 0, %s131
      %s134 = sphi 0, %s133
      %s148 = sphi 0, %s134
      %s152 = sphi 0, %s152
      %s154 = sphi 0, %s152
      %s155 = sphi 0, %s154
      %s169 = sphi 0, %s155
      %s173 = sphi 0, %s173
      %s175 = sphi 0, %s173
      %s176 = sphi 0, %s175
      %s190 = sphi 0, %s176
      %s194 = sphi 0, %s194
      %s196 = sphi 0, %s194
      %s197 = sphi 0, %s196
      %s211 = sphi 0, %s197
      %s215 = sphi 0, %s215
      %s217 = sphi 0, %s215
      %s218 = sphi 0, %s217
      %s232 = sphi 0, %s218
      %s236 = sphi 0, %s236
      %s238 = sphi 0, %s236
      %s239 = sphi 0, %s238
      %s253 = sphi 0, %s239
      %s257 = sphi 0, %s257
      %s259 = sphi 0, %s257
      %s260 = sphi 0, %s259
      %s274 = sphi 0, %s260
      %s278 = sphi 0, %s278
      %s280 = sphi 0, %s278
      %s281 = sphi 0, %s280
      %s295 = sphi 0, %s281
      %s299 = sphi 0, %s299
      %s301 = sphi 0, %s299
      %s302 = sphi 0, %s301
      %s316 = sphi 0, %s302
      %s322 = sphi 0, %s324
      %s325 = sphi 0, %s322
      %s326 = sphi 0, %s325
      %s342 = sphi 0, %s326
    $region4: #{tpu_custom_call.1} parent=1 // loop_header_branch
      %27 = sbr.rel (%p25) target = $region8
    $region5: #{tpu_custom_call.1} parent=1 // loop_body
      %s29 = ssub.s32 %s24, 1
      %s30 = ssub.s32 %s24, 2
      %s31 = sadd.s32 %s24, 1
      %s32 = ssub.s32 %s24, %s31
      %p33 = scmp.eq.s32.totalorder %s32, 0
      %s35 = sadd.s32 %s34, 1
      %s36 = scalar_select %p33, %s34, %s35
      %p39 = pneg %p33
      %p40 = scmp.eq.s32.totalorder %s24, 1
      %p41 = por %p39, %p40
      %p42 = scmp.ne.s32.totalorder %s34, %s37
      %p43 = scmp.eq.s32.totalorder %s24, 0
      %p44 = por %p42, %p43
      %p45 = scmp.ne.s32.totalorder %s34, %s37
      %p46 = scmp.eq.s32.totalorder %s29, 1
      %p47 = por %p45, %p46
      %p48 = scmp.ne.s32.totalorder %s37, %s38
      %p49 = scmp.eq.s32.totalorder %s29, 0
      %p50 = por %p48, %p49
      %p51 = scmp.ne.s32.totalorder %s37, %s38
      %p52 = scmp.eq.s32.totalorder %s30, 1
      %p53 = por %p51, %p52
      %p55 = scmp.ne.s32.totalorder %s38, %s54
      %p56 = scmp.eq.s32.totalorder %s30, 0
      %p57 = por %p55, %p56
      %s58 = ssub.s32 %s24, %s31
      %p59 = scmp.eq.s32.totalorder %s58, 0
      %s61 = sadd.s32 %s60, 1
      %s62 = scalar_select %p59, %s60, %s61
      %p65 = pneg %p59
      %p66 = scmp.eq.s32.totalorder %s24, 1
      %p67 = por %p65, %p66
      %p68 = scmp.ne.s32.totalorder %s60, %s63
      %p69 = scmp.eq.s32.totalorder %s24, 0
      %p70 = por %p68, %p69
      %p71 = scmp.ne.s32.totalorder %s60, %s63
      %p72 = scmp.eq.s32.totalorder %s29, 1
      %p73 = por %p71, %p72
      %p74 = scmp.ne.s32.totalorder %s63, %s64
      %p75 = scmp.eq.s32.totalorder %s29, 0
      %p76 = por %p74, %p75
      %p77 = scmp.ne.s32.totalorder %s63, %s64
      %p78 = scmp.eq.s32.totalorder %s30, 1
      %p79 = por %p77, %p78
      %p81 = scmp.ne.s32.totalorder %s64, %s80
      %p82 = scmp.eq.s32.totalorder %s30, 0
      %p83 = por %p81, %p82
      %s84 = ssub.s32 %s24, %s31
      %p85 = scmp.eq.s32.totalorder %s84, 0
      %s87 = sadd.s32 %s86, 1
      %s88 = scalar_select %p85, %s86, %s87
      %p91 = pneg %p85
      %p92 = scmp.eq.s32.totalorder %s24, 1
      %p93 = por %p91, %p92
      %p94 = scmp.ne.s32.totalorder %s86, %s89
      %p95 = scmp.eq.s32.totalorder %s24, 0
      %p96 = por %p94, %p95
      %p97 = scmp.ne.s32.totalorder %s86, %s89
      %p98 = scmp.eq.s32.totalorder %s29, 1
      %p99 = por %p97, %p98
      %p100 = scmp.ne.s32.totalorder %s89, %s90
      %p101 = scmp.eq.s32.totalorder %s29, 0
      %p102 = por %p100, %p101
      %p103 = scmp.ne.s32.totalorder %s89, %s90
      %p104 = scmp.eq.s32.totalorder %s30, 1
      %p105 = por %p103, %p104
      %p107 = scmp.ne.s32.totalorder %s90, %s106
      %p108 = scmp.eq.s32.totalorder %s30, 0
      %p109 = por %p107, %p108
      %s111 = sadd.s32 %s110, 1
      %p114 = scmp.eq.s32.totalorder %s24, 1
      %p115 = scmp.ne.s32.totalorder %s110, %s112
      %p116 = scmp.eq.s32.totalorder %s24, 0
      %p117 = por %p115, %p116
      %p118 = scmp.ne.s32.totalorder %s110, %s112
      %p119 = scmp.eq.s32.totalorder %s29, 1
      %p120 = por %p118, %p119
      %p121 = scmp.ne.s32.totalorder %s112, %s113
      %p122 = scmp.eq.s32.totalorder %s29, 0
      %p123 = por %p121, %p122
      %p124 = scmp.ne.s32.totalorder %s112, %s113
      %p125 = scmp.eq.s32.totalorder %s30, 1
      %p126 = por %p124, %p125
      %p128 = scmp.ne.s32.totalorder %s113, %s127
      %p129 = scmp.eq.s32.totalorder %s30, 0
      %p130 = por %p128, %p129
      %s132 = sadd.s32 %s131, 1
      %p135 = scmp.eq.s32.totalorder %s24, 1
      %p136 = scmp.ne.s32.totalorder %s131, %s133
      %p137 = scmp.eq.s32.totalorder %s24, 0
      %p138 = por %p136, %p137
      %p139 = scmp.ne.s32.totalorder %s131, %s133
      %p140 = scmp.eq.s32.totalorder %s29, 1
      %p141 = por %p139, %p140
      %p142 = scmp.ne.s32.totalorder %s133, %s134
      %p143 = scmp.eq.s32.totalorder %s29, 0
      %p144 = por %p142, %p143
      %p145 = scmp.ne.s32.totalorder %s133, %s134
      %p146 = scmp.eq.s32.totalorder %s30, 1
      %p147 = por %p145, %p146
      %p149 = scmp.ne.s32.totalorder %s134, %s148
      %p150 = scmp.eq.s32.totalorder %s30, 0
      %p151 = por %p149, %p150
      %s153 = sadd.s32 %s152, 1
      %p156 = scmp.eq.s32.totalorder %s24, 1
      %p157 = scmp.ne.s32.totalorder %s152, %s154
      %p158 = scmp.eq.s32.totalorder %s24, 0
      %p159 = por %p157, %p158
      %p160 = scmp.ne.s32.totalorder %s152, %s154
      %p161 = scmp.eq.s32.totalorder %s29, 1
      %p162 = por %p160, %p161
      %p163 = scmp.ne.s32.totalorder %s154, %s155
      %p164 = scmp.eq.s32.totalorder %s29, 0
      %p165 = por %p163, %p164
      %p166 = scmp.ne.s32.totalorder %s154, %s155
      %p167 = scmp.eq.s32.totalorder %s30, 1
      %p168 = por %p166, %p167
      %p170 = scmp.ne.s32.totalorder %s155, %s169
      %p171 = scmp.eq.s32.totalorder %s30, 0
      %p172 = por %p170, %p171
      %s174 = sadd.s32 %s173, 1
      %p177 = scmp.eq.s32.totalorder %s24, 1
      %p178 = scmp.ne.s32.totalorder %s173, %s175
      %p179 = scmp.eq.s32.totalorder %s24, 0
      %p180 = por %p178, %p179
      %p181 = scmp.ne.s32.totalorder %s173, %s175
      %p182 = scmp.eq.s32.totalorder %s29, 1
      %p183 = por %p181, %p182
      %p184 = scmp.ne.s32.totalorder %s175, %s176
      %p185 = scmp.eq.s32.totalorder %s29, 0
      %p186 = por %p184, %p185
      %p187 = scmp.ne.s32.totalorder %s175, %s176
      %p188 = scmp.eq.s32.totalorder %s30, 1
      %p189 = por %p187, %p188
      %p191 = scmp.ne.s32.totalorder %s176, %s190
      %p192 = scmp.eq.s32.totalorder %s30, 0
      %p193 = por %p191, %p192
      %s195 = sadd.s32 %s194, 1
      %p198 = scmp.eq.s32.totalorder %s24, 1
      %p199 = scmp.ne.s32.totalorder %s194, %s196
      %p200 = scmp.eq.s32.totalorder %s24, 0
      %p201 = por %p199, %p200
      %p202 = scmp.ne.s32.totalorder %s194, %s196
      %p203 = scmp.eq.s32.totalorder %s29, 1
      %p204 = por %p202, %p203
      %p205 = scmp.ne.s32.totalorder %s196, %s197
      %p206 = scmp.eq.s32.totalorder %s29, 0
      %p207 = por %p205, %p206
      %p208 = scmp.ne.s32.totalorder %s196, %s197
      %p209 = scmp.eq.s32.totalorder %s30, 1
      %p210 = por %p208, %p209
      %p212 = scmp.ne.s32.totalorder %s197, %s211
      %p213 = scmp.eq.s32.totalorder %s30, 0
      %p214 = por %p212, %p213
      %s216 = sadd.s32 %s215, 1
      %p219 = scmp.eq.s32.totalorder %s24, 1
      %p220 = scmp.ne.s32.totalorder %s215, %s217
      %p221 = scmp.eq.s32.totalorder %s24, 0
      %p222 = por %p220, %p221
      %p223 = scmp.ne.s32.totalorder %s215, %s217
      %p224 = scmp.eq.s32.totalorder %s29, 1
      %p225 = por %p223, %p224
      %p226 = scmp.ne.s32.totalorder %s217, %s218
      %p227 = scmp.eq.s32.totalorder %s29, 0
      %p228 = por %p226, %p227
      %p229 = scmp.ne.s32.totalorder %s217, %s218
      %p230 = scmp.eq.s32.totalorder %s30, 1
      %p231 = por %p229, %p230
      %p233 = scmp.ne.s32.totalorder %s218, %s232
      %p234 = scmp.eq.s32.totalorder %s30, 0
      %p235 = por %p233, %p234
      %s237 = sadd.s32 %s236, 1
      %p240 = scmp.eq.s32.totalorder %s24, 1
      %p241 = scmp.ne.s32.totalorder %s236, %s238
      %p242 = scmp.eq.s32.totalorder %s24, 0
      %p243 = por %p241, %p242
      %p244 = scmp.ne.s32.totalorder %s236, %s238
      %p245 = scmp.eq.s32.totalorder %s29, 1
      %p246 = por %p244, %p245
      %p247 = scmp.ne.s32.totalorder %s238, %s239
      %p248 = scmp.eq.s32.totalorder %s29, 0
      %p249 = por %p247, %p248
      %p250 = scmp.ne.s32.totalorder %s238, %s239
      %p251 = scmp.eq.s32.totalorder %s30, 1
      %p252 = por %p250, %p251
      %p254 = scmp.ne.s32.totalorder %s239, %s253
      %p255 = scmp.eq.s32.totalorder %s30, 0
      %p256 = por %p254, %p255
      %s258 = sadd.s32 %s257, 1
      %p261 = scmp.eq.s32.totalorder %s24, 1
      %p262 = scmp.ne.s32.totalorder %s257, %s259
      %p263 = scmp.eq.s32.totalorder %s24, 0
      %p264 = por %p262, %p263
      %p265 = scmp.ne.s32.totalorder %s257, %s259
      %p266 = scmp.eq.s32.totalorder %s29, 1
      %p267 = por %p265, %p266
      %p268 = scmp.ne.s32.totalorder %s259, %s260
      %p269 = scmp.eq.s32.totalorder %s29, 0
      %p270 = por %p268, %p269
      %p271 = scmp.ne.s32.totalorder %s259, %s260
      %p272 = scmp.eq.s32.totalorder %s30, 1
      %p273 = por %p271, %p272
      %p275 = scmp.ne.s32.totalorder %s260, %s274
      %p276 = scmp.eq.s32.totalorder %s30, 0
      %p277 = por %p275, %p276
      %s279 = sadd.s32 %s278, 1
      %p282 = scmp.eq.s32.totalorder %s24, 1
      %p283 = scmp.ne.s32.totalorder %s278, %s280
      %p284 = scmp.eq.s32.totalorder %s24, 0
      %p285 = por %p283, %p284
      %p286 = scmp.ne.s32.totalorder %s278, %s280
      %p287 = scmp.eq.s32.totalorder %s29, 1
      %p288 = por %p286, %p287
      %p289 = scmp.ne.s32.totalorder %s280, %s281
      %p290 = scmp.eq.s32.totalorder %s29, 0
      %p291 = por %p289, %p290
      %p292 = scmp.ne.s32.totalorder %s280, %s281
      %p293 = scmp.eq.s32.totalorder %s30, 1
      %p294 = por %p292, %p293
      %p296 = scmp.ne.s32.totalorder %s281, %s295
      %p297 = scmp.eq.s32.totalorder %s30, 0
      %p298 = por %p296, %p297
      %s300 = sadd.s32 %s299, 1
      %p303 = scmp.eq.s32.totalorder %s24, 1
      %p304 = scmp.ne.s32.totalorder %s299, %s301
      %p305 = scmp.eq.s32.totalorder %s24, 0
      %p306 = por %p304, %p305
      %p307 = scmp.ne.s32.totalorder %s299, %s301
      %p308 = scmp.eq.s32.totalorder %s29, 1
      %p309 = por %p307, %p308
      %p310 = scmp.ne.s32.totalorder %s301, %s302
      %p311 = scmp.eq.s32.totalorder %s29, 0
      %p312 = por %p310, %p311
      %p313 = scmp.ne.s32.totalorder %s301, %s302
      %p314 = scmp.eq.s32.totalorder %s30, 1
      %p315 = por %p313, %p314
      %p317 = scmp.ne.s32.totalorder %s302, %s316
      %p318 = scmp.eq.s32.totalorder %s30, 0
      %p319 = por %p317, %p318
      %s320 = ssub.s32 %s24, %s31
      %p321 = scmp.eq.s32.totalorder %s320, 0
      %s323 = sadd.s32 %s322, 1
      %s324 = scalar_select %p321, %s322, %s323
      %p327 = pneg %p321
      %p328 = scmp.eq.s32.totalorder %s24, 1
      %p329 = por %p327, %p328
      %p330 = scmp.ne.s32.totalorder %s322, %s325
      %p331 = scmp.eq.s32.totalorder %s24, 0
      %p332 = por %p330, %p331
      %p333 = scmp.ne.s32.totalorder %s322, %s325
      %p334 = scmp.eq.s32.totalorder %s29, 1
      %p335 = por %p333, %p334
      %p336 = scmp.ne.s32.totalorder %s325, %s326
      %p337 = scmp.eq.s32.totalorder %s29, 0
      %p338 = por %p336, %p337
      %p339 = scmp.ne.s32.totalorder %s325, %s326
      %p340 = scmp.eq.s32.totalorder %s30, 1
      %p341 = por %p339, %p340
      %p343 = scmp.ne.s32.totalorder %s326, %s342
      %p344 = scmp.eq.s32.totalorder %s30, 0
      %p345 = por %p343, %p344
      %p346 = scmp.le.s32.totalorder 1, %s24
      %p347 = scmp.lt.s32.totalorder %s24, 3
      %p348 = pnand %p346, %p347
      %p349 = pneg %p348
      // Predicated region
      $region9: #{tpu_custom_call.1} parent=5 // pred_check
        _
      $region10: #{tpu_custom_call.1} parent=5 // pred_check_branch
        %351 = sbr.rel (%p348) target = $region12
      $region11: #{tpu_custom_call.1} parent=5 // pred_region
        %s352 = ssub.s32 %s24, 1
        // Predicated region
        $region13: #{tpu_custom_call.1} parent=11 // pred_check
          %p353 = pneg %p123
        $region14: #{tpu_custom_call.1} parent=11 // pred_check_branch
          %355 = sbr.rel (%p353) target = $region16
        $region15: #{tpu_custom_call.1} parent=11 // pred_region
          _
        $region16: #{tpu_custom_call.1} parent=11 // pred_fallthru
          _
        // Predicated region
        $region17: #{tpu_custom_call.1} parent=11 // pred_check
          %p356 = pneg %p144
        $region18: #{tpu_custom_call.1} parent=11 // pred_check_branch
          %358 = sbr.rel (%p356) target = $region20
        $region19: #{tpu_custom_call.1} parent=11 // pred_region
          _
        $region20: #{tpu_custom_call.1} parent=11 // pred_fallthru
          _
        // Predicated region
        $region21: #{tpu_custom_call.1} parent=11 // pred_check
          %p359 = pneg %p165
        $region22: #{tpu_custom_call.1} parent=11 // pred_check_branch
          %361 = sbr.rel (%p359) target = $region24
        $region23: #{tpu_custom_call.1} parent=11 // pred_region
          _
        $region24: #{tpu_custom_call.1} parent=11 // pred_fallthru
          _
        // Predicated region
        $region25: #{tpu_custom_call.1} parent=11 // pred_check
          %p362 = pneg %p186
        $region26: #{tpu_custom_call.1} parent=11 // pred_check_branch
          %364 = sbr.rel (%p362) target = $region28
        $region27: #{tpu_custom_call.1} parent=11 // pred_region
          _
        $region28: #{tpu_custom_call.1} parent=11 // pred_fallthru
          _
        // Predicated region
        $region29: #{tpu_custom_call.1} parent=11 // pred_check
          %p365 = pneg %p207
        $region30: #{tpu_custom_call.1} parent=11 // pred_check_branch
          %367 = sbr.rel (%p365) target = $region32
        $region31: #{tpu_custom_call.1} parent=11 // pred_region
          _
        $region32: #{tpu_custom_call.1} parent=11 // pred_fallthru
          _
        // Predicated region
        $region33: #{tpu_custom_call.1} parent=11 // pred_check
          %p368 = pneg %p228
        $region34: #{tpu_custom_call.1} parent=11 // pred_check_branch
          %370 = sbr.rel (%p368) target = $region36
        $region35: #{tpu_custom_call.1} parent=11 // pred_region
          _
        $region36: #{tpu_custom_call.1} parent=11 // pred_fallthru
          _
        // Predicated region
        $region37: #{tpu_custom_call.1} parent=11 // pred_check
          %p371 = pneg %p249
        $region38: #{tpu_custom_call.1} parent=11 // pred_check_branch
          %373 = sbr.rel (%p371) target = $region40
        $region39: #{tpu_custom_call.1} parent=11 // pred_region
          _
        $region40: #{tpu_custom_call.1} parent=11 // pred_fallthru
          _
        // Predicated region
        $region41: #{tpu_custom_call.1} parent=11 // pred_check
          %p374 = pneg %p270
        $region42: #{tpu_custom_call.1} parent=11 // pred_check_branch
          %376 = sbr.rel (%p374) target = $region44
        $region43: #{tpu_custom_call.1} parent=11 // pred_region
          _
        $region44: #{tpu_custom_call.1} parent=11 // pred_fallthru
          _
        // Predicated region
        $region45: #{tpu_custom_call.1} parent=11 // pred_check
          %p377 = pneg %p291
        $region46: #{tpu_custom_call.1} parent=11 // pred_check_branch
          %379 = sbr.rel (%p377) target = $region48
        $region47: #{tpu_custom_call.1} parent=11 // pred_region
          _
        $region48: #{tpu_custom_call.1} parent=11 // pred_fallthru
          _
        // Predicated region
        $region49: #{tpu_custom_call.1} parent=11 // pred_check
          %p380 = pneg %p312
        $region50: #{tpu_custom_call.1} parent=11 // pred_check_branch
          %382 = sbr.rel (%p380) target = $region52
        $region51: #{tpu_custom_call.1} parent=11 // pred_region
          _
        $region52: #{tpu_custom_call.1} parent=11 // pred_fallthru
          _
      $region12: #{tpu_custom_call.1} parent=5 // pred_fallthru
        _
      %p383 = scmp.lt.s32.totalorder %s24, 2
      // Predicated region
      $region53: #{tpu_custom_call.1} parent=5 // pred_check
        %p384 = pneg %p383
      $region54: #{tpu_custom_call.1} parent=5 // pred_check_branch
        %386 = sbr.rel (%p384) target = $region56
      $region55: #{tpu_custom_call.1} parent=5 // pred_region
        // Predicated region
        $region57: #{tpu_custom_call.1} parent=55 // pred_check
          %p387 = pneg %p44
        $region58: #{tpu_custom_call.1} parent=55 // pred_check_branch
          %389 = sbr.rel (%p387) target = $region60
        $region59: #{tpu_custom_call.1} parent=55 // pred_region
          %s390 = smul.u32 16, %s24
          %p391 = scmp.lt.s32.totalorder %s390, 31
          %s392 = scalar_select %p391, %s390, 31
          %s393 = smul.addr %s392, 4
          %s394 = scalar_lea.vmem %s0, %s393
          %s395 = smul.u32 16, %s24
        $region60: #{tpu_custom_call.1} parent=55 // pred_fallthru
          _
        // Predicated region
        $region61: #{tpu_custom_call.1} parent=55 // pred_check
          %p396 = pneg %p70
        $region62: #{tpu_custom_call.1} parent=55 // pred_check_branch
          %398 = sbr.rel (%p396) target = $region64
        $region63: #{tpu_custom_call.1} parent=55 // pred_region
          %s399 = smul.u32 16, %s24
          %p400 = scmp.lt.s32.totalorder %s399, 31
          %s401 = scalar_select %p400, %s399, 31
          %s402 = smul.addr %s401, 8
          %s403 = scalar_lea.vmem %s1, %s402
          %s404 = smul.u32 16, %s24
        $region64: #{tpu_custom_call.1} parent=55 // pred_fallthru
          _
        // Predicated region
        $region65: #{tpu_custom_call.1} parent=55 // pred_check
          %p405 = pneg %p96
        $region66: #{tpu_custom_call.1} parent=55 // pred_check_branch
          %407 = sbr.rel (%p405) target = $region68
        $region67: #{tpu_custom_call.1} parent=55 // pred_region
          %s408 = smul.u32 16, %s24
          %p409 = scmp.lt.s32.totalorder %s408, 31
          %s410 = scalar_select %p409, %s408, 31
          %s411 = smul.addr %s410, 8
          %s412 = scalar_lea.vmem %s2, %s411
          %s413 = smul.u32 16, %s24
        $region68: #{tpu_custom_call.1} parent=55 // pred_fallthru
          _
      $region56: #{tpu_custom_call.1} parent=5 // pred_fallthru
        _
      %p414 = scmp.le.s32.totalorder 1, %s24
      %p415 = scmp.lt.s32.totalorder %s24, 3
      %p416 = pnand %p414, %p415
      %p417 = pneg %p416
      // Predicated region
      $region69: #{tpu_custom_call.1} parent=5 // pred_check
        _
      $region70: #{tpu_custom_call.1} parent=5 // pred_check_branch
        %419 = sbr.rel (%p416) target = $region72
      $region71: #{tpu_custom_call.1} parent=5 // pred_region
        %s420 = ssub.s32 %s24, 1
        %s421 = smul.u32 16, %s29
        %p422 = scmp.lt.s32.totalorder %s421, 31
        %s423 = scalar_select %p422, %s421, 31
        %s424 = smul.addr %s423, 4
        %s425 = scalar_lea.vmem %s0, %s424
        %p426 = pneg %p50
        %p427 = pneg %p47
        %s428 = smul.u32 16, %s29
        %p429 = scmp.lt.s32.totalorder %s428, 31
        %s430 = scalar_select %p429, %s428, 31
        %s431 = smul.addr %s430, 8
        %s432 = scalar_lea.vmem %s1, %s431
        %p433 = pneg %p76
        %p434 = pneg %p73
        %s435 = smul.u32 16, %s29
        %p436 = scmp.lt.s32.totalorder %s435, 31
        %s437 = scalar_select %p436, %s435, 31
        %s438 = smul.addr %s437, 8
        %s439 = scalar_lea.vmem %s2, %s438
        %p440 = pneg %p102
        %p441 = pneg %p99
        %p442 = pneg %p123
        %p443 = pneg %p120
        %p444 = pneg %p144
        %p445 = pneg %p141
        %p446 = pneg %p165
        %p447 = pneg %p162
        %p448 = pneg %p186
        %p449 = pneg %p183
        %p450 = pneg %p207
        %p451 = pneg %p204
        %p452 = pneg %p228
        %p453 = pneg %p225
        %p454 = pneg %p249
        %p455 = pneg %p246
        %p456 = pneg %p270
        %p457 = pneg %p267
        %p458 = pneg %p291
        %p459 = pneg %p288
        %p460 = pneg %p312
        %p461 = pneg %p309
        %p462 = pneg %p338
        %p463 = pneg %p335
        %s464 = sand.u32 %s325, 1
        %s465 = scalar_lea.sflag [#allocation4], %s464
        %s466 = sand.u32 %s325, 1
        %s467 = scalar_lea.vmem [#allocation3], %s466
        %s468 = smul.u32 16, %s29
        %p469 = scmp.lt.s32.totalorder %s468, 31
        %s470 = scalar_select %p469, %s468, 31
        %s471 = smul.addr %s470, 4
        %s472 = scalar_lea.vmem %s0, %s471
        %s473 = smul.u32 16, %s29
        %s474 = smul.u32 16, %s29
        %p475 = scmp.lt.s32.totalorder %s474, 31
        %s476 = scalar_select %p475, %s474, 31
        %s477 = smul.addr %s476, 8
        %s478 = scalar_lea.vmem %s1, %s477
        %s479 = smul.u32 16, %s29
        %s480 = smul.u32 16, %s29
        %p481 = scmp.lt.s32.totalorder %s480, 31
        %s482 = scalar_select %p481, %s480, 31
        %s483 = smul.addr %s482, 8
        %s484 = scalar_lea.vmem %s2, %s483
        %s485 = smul.u32 16, %s29
        %v487 = vld [vmem:[%s478] sm:$0xff]
        %v488 = vld [vmem:[%s478 + $0x8] sm:$0xff]
        %v489 = vld [vmem:[%s478 + $0x10] sm:$0xff]
        %v490 = vld [vmem:[%s478 + $0x18] sm:$0xff]
        %v491 = vld [vmem:[%s478 + $0x20] sm:$0xff]
        %v492 = vld [vmem:[%s478 + $0x28] sm:$0xff]
        %v493 = vld [vmem:[%s478 + $0x30] sm:$0xff]
        %v494 = vld [vmem:[%s478 + $0x38] sm:$0xff]
        %v495 = vld [vmem:[%s478 + $0x40] sm:$0xff]
        %v496 = vld [vmem:[%s478 + $0x48] sm:$0xff]
        %v497 = vld [vmem:[%s478 + $0x50] sm:$0xff]
        %v498 = vld [vmem:[%s478 + $0x58] sm:$0xff]
        %v499 = vld [vmem:[%s478 + $0x60] sm:$0xff]
        %v500 = vld [vmem:[%s478 + $0x68] sm:$0xff]
        %v501 = vld [vmem:[%s478 + $0x70] sm:$0xff]
        %v502 = vld [vmem:[%s478 + $0x78] sm:$0xff]
        %v503 = vld [vmem:[%s484] sm:$0xff]
        %v504 = vld [vmem:[%s484 + $0x8] sm:$0xff]
        %v505 = vld [vmem:[%s484 + $0x10] sm:$0xff]
        %v506 = vld [vmem:[%s484 + $0x18] sm:$0xff]
        %v507 = vld [vmem:[%s484 + $0x20] sm:$0xff]
        %v508 = vld [vmem:[%s484 + $0x28] sm:$0xff]
        %v509 = vld [vmem:[%s484 + $0x30] sm:$0xff]
        %v510 = vld [vmem:[%s484 + $0x38] sm:$0xff]
        %v511 = vld [vmem:[%s484 + $0x40] sm:$0xff]
        %v512 = vld [vmem:[%s484 + $0x48] sm:$0xff]
        %v513 = vld [vmem:[%s484 + $0x50] sm:$0xff]
        %v514 = vld [vmem:[%s484 + $0x58] sm:$0xff]
        %v515 = vld [vmem:[%s484 + $0x60] sm:$0xff]
        %v516 = vld [vmem:[%s484 + $0x68] sm:$0xff]
        %v517 = vld [vmem:[%s484 + $0x70] sm:$0xff]
        %v518 = vld [vmem:[%s484 + $0x78] sm:$0xff]
        %v519 = vld [vmem:[%s472] sm:$0xf]
        %v520 = vld [vmem:[%s472 + $0x4] sm:$0xf]
        %v521 = vld [vmem:[%s472 + $0x8] sm:$0xf]
        %v522 = vld [vmem:[%s472 + $0xc] sm:$0xf]
        %v523 = vld [vmem:[%s472 + $0x10] sm:$0xf]
        %v524 = vld [vmem:[%s472 + $0x14] sm:$0xf]
        %v525 = vld [vmem:[%s472 + $0x18] sm:$0xf]
        %v526 = vld [vmem:[%s472 + $0x1c] sm:$0xf]
        %v527 = vld [vmem:[%s472 + $0x20] sm:$0xf]
        %v528 = vld [vmem:[%s472 + $0x24] sm:$0xf]
        %v529 = vld [vmem:[%s472 + $0x28] sm:$0xf]
        %v530 = vld [vmem:[%s472 + $0x2c] sm:$0xf]
        %v531 = vld [vmem:[%s472 + $0x30] sm:$0xf]
        %v532 = vld [vmem:[%s472 + $0x34] sm:$0xf]
        %v533 = vld [vmem:[%s472 + $0x38] sm:$0xf]
        %v534 = vld [vmem:[%s472 + $0x3c] sm:$0xf]
        %v535 = vunpack.c.l.bf16 %v519
        %v536 = vunpack.c.l.bf16 %v520
        %v537 = vunpack.c.l.bf16 %v521
        %v538 = vunpack.c.l.bf16 %v522
        %v539 = vunpack.c.l.bf16 %v523
        %v540 = vunpack.c.l.bf16 %v524
        %v541 = vunpack.c.l.bf16 %v525
        %v542 = vunpack.c.l.bf16 %v526
        %v543 = vunpack.c.l.bf16 %v527
        %v544 = vunpack.c.l.bf16 %v528
        %v545 = vunpack.c.l.bf16 %v529
        %v546 = vunpack.c.l.bf16 %v530
        %v547 = vunpack.c.l.bf16 %v531
        %v548 = vunpack.c.l.bf16 %v532
        %v549 = vunpack.c.l.bf16 %v533
        %v550 = vunpack.c.l.bf16 %v534
        %v551 = vrot.slane %v535, 7
        %v552 = vrot.slane %v536, 7
        %v553 = vrot.slane %v537, 7
        %v554 = vrot.slane %v538, 7
        %v555 = vrot.slane %v539, 7
        %v556 = vrot.slane %v540, 7
        %v557 = vrot.slane %v541, 7
        %v558 = vrot.slane %v542, 7
        %v559 = vrot.slane %v543, 7
        %v560 = vrot.slane %v544, 7
        %v561 = vrot.slane %v545, 7
        %v562 = vrot.slane %v546, 7
        %v563 = vrot.slane %v547, 7
        %v564 = vrot.slane %v548, 7
        %v565 = vrot.slane %v549, 7
        %v566 = vrot.slane %v550, 7
        %v567 = vlaneseq
        %v568 = vshrl.u32 %v567, 7
        %vm569 = vcmp.lt.s32.totalorder %v568, 1
        %v570 = vsel %vm569, %v565, %v566
        %v571 = vsel %vm569, %v564, %v565
        %v572 = vsel %vm569, %v563, %v564
        %v573 = vsel %vm569, %v562, %v563
        %v574 = vsel %vm569, %v561, %v562
        %v575 = vsel %vm569, %v560, %v561
        %v576 = vsel %vm569, %v559, %v560
        %v577 = vsel %vm569, %v558, %v559
        %v578 = vsel %vm569, %v557, %v558
        %v579 = vsel %vm569, %v556, %v557
        %v580 = vsel %vm569, %v555, %v556
        %v581 = vsel %vm569, %v554, %v555
        %v582 = vsel %vm569, %v553, %v554
        %v583 = vsel %vm569, %v552, %v553
        %v584 = vsel %vm569, %v551, %v552
        %v585 = vsel %vm569, %v566, %v551
        %587 = vset.pattern.permute.xlu0 0
        %588 = vperm.xlu0 %587, %v487
        %v589 = vpop.permute.xlu0 %588
        %592 = vset.pattern.permute.xlu0 0
        %593 = vperm.xlu0 %592, %v488
        %v594 = vpop.permute.xlu0 %593
        %597 = vset.pattern.permute.xlu0 0
        %598 = vperm.xlu0 %597, %v489
        %v599 = vpop.permute.xlu0 %598
        %602 = vset.pattern.permute.xlu0 0
        %603 = vperm.xlu0 %602, %v490
        %v604 = vpop.permute.xlu0 %603
        %607 = vset.pattern.permute.xlu0 0
        %608 = vperm.xlu0 %607, %v491
        %v609 = vpop.permute.xlu0 %608
        %612 = vset.pattern.permute.xlu0 0
        %613 = vperm.xlu0 %612, %v492
        %v614 = vpop.permute.xlu0 %613
        %617 = vset.pattern.permute.xlu0 0
        %618 = vperm.xlu0 %617, %v493
        %v619 = vpop.permute.xlu0 %618
        %622 = vset.pattern.permute.xlu0 0
        %623 = vperm.xlu0 %622, %v494
        %v624 = vpop.permute.xlu0 %623
        %627 = vset.pattern.permute.xlu0 0
        %628 = vperm.xlu0 %627, %v495
        %v629 = vpop.permute.xlu0 %628
        %632 = vset.pattern.permute.xlu0 0
        %633 = vperm.xlu0 %632, %v496
        %v634 = vpop.permute.xlu0 %633
        %637 = vset.pattern.permute.xlu0 0
        %638 = vperm.xlu0 %637, %v497
        %v639 = vpop.permute.xlu0 %638
        %642 = vset.pattern.permute.xlu0 0
        %643 = vperm.xlu0 %642, %v498
        %v644 = vpop.permute.xlu0 %643
        %647 = vset.pattern.permute.xlu0 0
        %648 = vperm.xlu0 %647, %v499
        %v649 = vpop.permute.xlu0 %648
        %652 = vset.pattern.permute.xlu0 0
        %653 = vperm.xlu0 %652, %v500
        %v654 = vpop.permute.xlu0 %653
        %657 = vset.pattern.permute.xlu0 0
        %658 = vperm.xlu0 %657, %v501
        %v659 = vpop.permute.xlu0 %658
        %662 = vset.pattern.permute.xlu0 0
        %663 = vperm.xlu0 %662, %v502
        %v664 = vpop.permute.xlu0 %663
        %v666 = vmul.f32 %v589, %v585
        %v667 = vmul.f32 %v594, %v584
        %v668 = vmul.f32 %v599, %v583
        %v669 = vmul.f32 %v604, %v582
        %v670 = vmul.f32 %v609, %v581
        %v671 = vmul.f32 %v614, %v580
        %v672 = vmul.f32 %v619, %v579
        %v673 = vmul.f32 %v624, %v578
        %v674 = vmul.f32 %v629, %v577
        %v675 = vmul.f32 %v634, %v576
        %v676 = vmul.f32 %v639, %v575
        %v677 = vmul.f32 %v644, %v574
        %v678 = vmul.f32 %v649, %v573
        %v679 = vmul.f32 %v654, %v572
        %v680 = vmul.f32 %v659, %v571
        %v681 = vmul.f32 %v664, %v570
        %v682 = vpack.c.bf16 %v667, %v666
        %v683 = vpack.c.bf16 %v669, %v668
        %v684 = vpack.c.bf16 %v671, %v670
        %v685 = vpack.c.bf16 %v673, %v672
        %v686 = vpack.c.bf16 %v675, %v674
        %v687 = vpack.c.bf16 %v677, %v676
        %v688 = vpack.c.bf16 %v679, %v678
        %v689 = vpack.c.bf16 %v681, %v680
        %v690 = vrot.slane %v535, 1
        %v691 = vrot.slane %v536, 1
        %v692 = vrot.slane %v537, 1
        %v693 = vrot.slane %v538, 1
        %v694 = vrot.slane %v539, 1
        %v695 = vrot.slane %v540, 1
        %v696 = vrot.slane %v541, 1
        %v697 = vrot.slane %v542, 1
        %v698 = vrot.slane %v543, 1
        %v699 = vrot.slane %v544, 1
        %v700 = vrot.slane %v545, 1
        %v701 = vrot.slane %v546, 1
        %v702 = vrot.slane %v547, 1
        %v703 = vrot.slane %v548, 1
        %v704 = vrot.slane %v549, 1
        %v705 = vrot.slane %v550, 1
        %vm706 = vcmp.lt.s32.totalorder %v568, 7
        %v707 = vsel %vm706, %v704, %v705
        %v708 = vsel %vm706, %v703, %v704
        %v709 = vsel %vm706, %v702, %v703
        %v710 = vsel %vm706, %v701, %v702
        %v711 = vsel %vm706, %v700, %v701
        %v712 = vsel %vm706, %v699, %v700
        %v713 = vsel %vm706, %v698, %v699
        %v714 = vsel %vm706, %v697, %v698
        %v715 = vsel %vm706, %v696, %v697
        %v716 = vsel %vm706, %v695, %v696
        %v717 = vsel %vm706, %v694, %v695
        %v718 = vsel %vm706, %v693, %v694
        %v719 = vsel %vm706, %v692, %v693
        %v720 = vsel %vm706, %v691, %v692
        %v721 = vsel %vm706, %v690, %v691
        %v722 = vsel %vm706, %v705, %v690
        %724 = vset.pattern.permute.xlu0 0
        %725 = vperm.xlu0 %724, %v503
        %v726 = vpop.permute.xlu0 %725
        %729 = vset.pattern.permute.xlu0 0
        %730 = vperm.xlu0 %729, %v504
        %v731 = vpop.permute.xlu0 %730
        %734 = vset.pattern.permute.xlu0 0
        %735 = vperm.xlu0 %734, %v505
        %v736 = vpop.permute.xlu0 %735
        %739 = vset.pattern.permute.xlu0 0
        %740 = vperm.xlu0 %739, %v506
        %v741 = vpop.permute.xlu0 %740
        %744 = vset.pattern.permute.xlu0 0
        %745 = vperm.xlu0 %744, %v507
        %v746 = vpop.permute.xlu0 %745
        %749 = vset.pattern.permute.xlu0 0
        %750 = vperm.xlu0 %749, %v508
        %v751 = vpop.permute.xlu0 %750
        %754 = vset.pattern.permute.xlu0 0
        %755 = vperm.xlu0 %754, %v509
        %v756 = vpop.permute.xlu0 %755
        %759 = vset.pattern.permute.xlu0 0
        %760 = vperm.xlu0 %759, %v510
        %v761 = vpop.permute.xlu0 %760
        %764 = vset.pattern.permute.xlu0 0
        %765 = vperm.xlu0 %764, %v511
        %v766 = vpop.permute.xlu0 %765
        %769 = vset.pattern.permute.xlu0 0
        %770 = vperm.xlu0 %769, %v512
        %v771 = vpop.permute.xlu0 %770
        %774 = vset.pattern.permute.xlu0 0
        %775 = vperm.xlu0 %774, %v513
        %v776 = vpop.permute.xlu0 %775
        %779 = vset.pattern.permute.xlu0 0
        %780 = vperm.xlu0 %779, %v514
        %v781 = vpop.permute.xlu0 %780
        %784 = vset.pattern.permute.xlu0 0
        %785 = vperm.xlu0 %784, %v515
        %v786 = vpop.permute.xlu0 %785
        %789 = vset.pattern.permute.xlu0 0
        %790 = vperm.xlu0 %789, %v516
        %v791 = vpop.permute.xlu0 %790
        %794 = vset.pattern.permute.xlu0 0
        %795 = vperm.xlu0 %794, %v517
        %v796 = vpop.permute.xlu0 %795
        %799 = vset.pattern.permute.xlu0 0
        %800 = vperm.xlu0 %799, %v518
        %v801 = vpop.permute.xlu0 %800
        %v803 = vmul.f32 %v726, %v721
        %v804 = vmul.f32 %v731, %v720
        %v805 = vmul.f32 %v736, %v719
        %v806 = vmul.f32 %v741, %v718
        %v807 = vmul.f32 %v746, %v717
        %v808 = vmul.f32 %v751, %v716
        %v809 = vmul.f32 %v756, %v715
        %v810 = vmul.f32 %v761, %v714
        %v811 = vmul.f32 %v766, %v713
        %v812 = vmul.f32 %v771, %v712
        %v813 = vmul.f32 %v776, %v711
        %v814 = vmul.f32 %v781, %v710
        %v815 = vmul.f32 %v786, %v709
        %v816 = vmul.f32 %v791, %v708
        %v817 = vmul.f32 %v796, %v707
        %v818 = vmul.f32 %v801, %v722
        %v819 = vpack.c.bf16 %v804, %v803
        %v820 = vpack.c.bf16 %v806, %v805
        %v821 = vpack.c.bf16 %v808, %v807
        %v822 = vpack.c.bf16 %v810, %v809
        %v823 = vpack.c.bf16 %v812, %v811
        %v824 = vpack.c.bf16 %v814, %v813
        %v825 = vpack.c.bf16 %v816, %v815
        %v826 = vpack.c.bf16 %v818, %v817
        %v827 = vld [vmem:[%s3] sm:$0xf]
        %v828 = vld [vmem:[%s3 + $0x4] sm:$0xf]
        %v829 = vld [vmem:[%s3 + $0x8] sm:$0xf]
        %v830 = vld [vmem:[%s3 + $0xc] sm:$0xf]
        %s831 = scalar_lea.vmem %s3, 16
        %v832 = vld [vmem:[%s831] sm:$0xf]
        %v833 = vld [vmem:[%s831 + $0x4] sm:$0xf]
        %v834 = vld [vmem:[%s831 + $0x8] sm:$0xf]
        %v835 = vld [vmem:[%s831 + $0xc] sm:$0xf]
        %v852 = vunpack.c.l.b16 %v519
        %v853 = vunpack.c.l.b16 %v520
        %v854 = vunpack.c.l.b16 %v521
        %v855 = vunpack.c.l.b16 %v522
        %v856 = vunpack.c.l.b16 %v523
        %v857 = vunpack.c.l.b16 %v524
        %v858 = vunpack.c.l.b16 %v525
        %v859 = vunpack.c.l.b16 %v526
        %v860 = vunpack.c.l.b16 %v527
        %v861 = vunpack.c.l.b16 %v528
        %v862 = vunpack.c.l.b16 %v529
        %v863 = vunpack.c.l.b16 %v530
        %v864 = vunpack.c.l.b16 %v531
        %v865 = vunpack.c.l.b16 %v532
        %v866 = vunpack.c.l.b16 %v533
        %v867 = vunpack.c.l.b16 %v534
        %v868 = vpack.c.b16 %v853, %v852
        %v869 = vpack.c.b16 %v855, %v854
        %v870 = vpack.c.b16 %v857, %v856
        %v871 = vpack.c.b16 %v859, %v858
        %v872 = vpack.c.b16 %v861, %v860
        %v873 = vpack.c.b16 %v863, %v862
        %v874 = vpack.c.b16 %v865, %v864
        %v875 = vpack.c.b16 %v867, %v866
        %v880 = vunpack.c.l.b16 %v832
        %v881 = vunpack.c.l.b16 %v833
        %v882 = vunpack.c.l.b16 %v834
        %v883 = vunpack.c.l.b16 %v835
        %v884 = vpack.c.b16 %v881, %v880
        %v885 = vpack.c.b16 %v883, %v882
        %vm888 = vcmask 261120
        %v890 = vsel %vm888, %v868, 0
        %v893 = vsel %vm888, %v869, 0
        %v896 = vsel %vm888, %v870, 0
        %v899 = vsel %vm888, %v871, 0
        %v902 = vsel %vm888, %v872, 0
        %v905 = vsel %vm888, %v873, 0
        %v908 = vsel %vm888, %v874, 0
        %v911 = vsel %vm888, %v875, 0
        %913 = vmatprep.subr.bf16.mxu0 0
        %914 = vmatpush1.bf16.msra.mxu0 %v884
        %915 = vmatprep.subr.bf16.mxu0 0
        %916 = vmatpush1.bf16.msra.mxu0 %v885
        %917 = vmatprep.subr.bf16.mxu0 0
        %918 = vmatpush1.bf16.msra.mxu0 0
        %919 = vmatprep.subr.bf16.mxu0 0
        %920 = vmatpush1.bf16.msra.mxu0 0
        %921 = vmatprep.subr.bf16.mxu0 0
        %922 = vmatpush1.bf16.msra.mxu0 0
        %923 = vmatprep.subr.bf16.mxu0 0
        %924 = vmatpush1.bf16.msra.mxu0 0
        %925 = vmatprep.subr.bf16.mxu0 0
        %926 = vmatpush1.bf16.msra.mxu0 0
        %927 = vmatprep.subr.bf16.mxu0 0
        %928 = vmatpush1.bf16.msra.mxu0 0
        %929 = vmatprep.subr.bf16.mxu0 0
        %930 = vmatpush1.bf16.msra.mxu0 0
        %931 = vmatprep.subr.bf16.mxu0 0
        %932 = vmatpush1.bf16.msra.mxu0 0
        %933 = vmatprep.subr.bf16.mxu0 0
        %934 = vmatpush1.bf16.msra.mxu0 0
        %935 = vmatprep.subr.bf16.mxu0 0
        %936 = vmatpush1.bf16.msra.mxu0 0
        %937 = vmatprep.subr.bf16.mxu0 0
        %938 = vmatpush1.bf16.msra.mxu0 0
        %939 = vmatprep.subr.bf16.mxu0 0
        %940 = vmatpush1.bf16.msra.mxu0 0
        %941 = vmatprep.subr.bf16.mxu0 0
        %942 = vmatpush1.bf16.msra.mxu0 0
        %943 = vmatprep.subr.bf16.mxu0 0
        %944 = vmatpush1.bf16.msra.mxu0 0
        %945 = vmatprep.mubr.bf16.mxu0 0
        %946 = vmatmul.mubr.bf16.gmra.mrb[0].mxu0 %v890
        %v947 = vpop.f32.mrb[0].mxu0
        %v948 = vadd.f32 0.0, %v947
        %v949 = vpop.f32.mrb[0].mxu0
        %v950 = vpop.f32.mrb[0].mxu0
        %v951 = vadd.f32 0.0, %v950
        %v952 = vpop.f32.mrb[0].mxu0
        %953 = vmatprep.mubr.bf16.mxu0 0
        %954 = vmatmul.mubr.bf16.gmra.mrb[0].mxu0 %v893
        %v955 = vpop.f32.mrb[0].mxu0
        %v956 = vadd.f32 0.0, %v955
        %v957 = vpop.f32.mrb[0].mxu0
        %v958 = vpop.f32.mrb[0].mxu0
        %v959 = vadd.f32 0.0, %v958
        %v960 = vpop.f32.mrb[0].mxu0
        %961 = vmatprep.mubr.bf16.mxu0 0
        %962 = vmatmul.mubr.bf16.gmra.mrb[0].mxu0 %v896
        %v963 = vpop.f32.mrb[0].mxu0
        %v964 = vadd.f32 0.0, %v963
        %v965 = vpop.f32.mrb[0].mxu0
        %v966 = vpop.f32.mrb[0].mxu0
        %v967 = vadd.f32 0.0, %v966
        %v968 = vpop.f32.mrb[0].mxu0
        %969 = vmatprep.mubr.bf16.mxu0 0
        %970 = vmatmul.mubr.bf16.gmra.mrb[0].mxu0 %v899
        %v971 = vpop.f32.mrb[0].mxu0
        %v972 = vadd.f32 0.0, %v971
        %v973 = vpop.f32.mrb[0].mxu0
        %v974 = vpop.f32.mrb[0].mxu0
        %v975 = vadd.f32 0.0, %v974
        %v976 = vpop.f32.mrb[0].mxu0
        %977 = vmatprep.mubr.bf16.mxu0 0
        %978 = vmatmul.mubr.bf16.gmra.mrb[0].mxu0 %v902
        %v979 = vpop.f32.mrb[0].mxu0
        %v980 = vadd.f32 0.0, %v979
        %v981 = vpop.f32.mrb[0].mxu0
        %v982 = vpop.f32.mrb[0].mxu0
        %v983 = vadd.f32 0.0, %v982
        %v984 = vpop.f32.mrb[0].mxu0
        %985 = vmatprep.mubr.bf16.mxu0 0
        %986 = vmatmul.mubr.bf16.gmra.mrb[0].mxu0 %v905
        %v987 = vpop.f32.mrb[0].mxu0
        %v988 = vadd.f32 0.0, %v987
        %v989 = vpop.f32.mrb[0].mxu0
        %v990 = vpop.f32.mrb[0].mxu0
        %v991 = vadd.f32 0.0, %v990
        %v992 = vpop.f32.mrb[0].mxu0
        %993 = vmatprep.mubr.bf16.mxu0 0
        %994 = vmatmul.mubr.bf16.gmra.mrb[0].mxu0 %v908
        %v995 = vpop.f32.mrb[0].mxu0
        %v996 = vadd.f32 0.0, %v995
        %v997 = vpop.f32.mrb[0].mxu0
        %v998 = vpop.f32.mrb[0].mxu0
        %v999 = vadd.f32 0.0, %v998
        %v1000 = vpop.f32.mrb[0].mxu0
        %1001 = vmatprep.mubr.bf16.mxu0 0
        %1002 = vmatmul.mubr.bf16.gmra.mrb[0].mxu0 %v911
        %v1003 = vpop.f32.mrb[0].mxu0
        %v1004 = vadd.f32 0.0, %v1003
        %v1005 = vpop.f32.mrb[0].mxu0
        %v1006 = vpop.f32.mrb[0].mxu0
        %v1007 = vadd.f32 0.0, %v1006
        %v1008 = vpop.f32.mrb[0].mxu0
        %1009 = vdwg.mxu0
        %v1014 = vunpack.c.l.b16 %v827
        %v1015 = vunpack.c.l.b16 %v828
        %v1016 = vunpack.c.l.b16 %v829
        %v1017 = vunpack.c.l.b16 %v830
        %v1018 = vpack.c.b16 %v1015, %v1014
        %v1019 = vpack.c.b16 %v1017, %v1016
        %v1023 = vsel %vm888, %v682, 0
        %v1026 = vsel %vm888, %v683, 0
        %v1029 = vsel %vm888, %v684, 0
        %v1032 = vsel %vm888, %v685, 0
        %v1035 = vsel %vm888, %v686, 0
        %v1038 = vsel %vm888, %v687, 0
        %v1041 = vsel %vm888, %v688, 0
        %v1044 = vsel %vm888, %v689, 0
        %1046 = vmatprep.subr.bf16.mxu0 0
        %1047 = vmatpush1.bf16.msra.mxu0 %v1018
        %1048 = vmatprep.subr.bf16.mxu0 0
        %1049 = vmatpush1.bf16.msra.mxu0 %v1019
        %1050 = vmatprep.subr.bf16.mxu0 0
        %1051 = vmatpush1.bf16.msra.mxu0 0
        %1052 = vmatprep.subr.bf16.mxu0 0
        %1053 = vmatpush1.bf16.msra.mxu0 0
        %1054 = vmatprep.subr.bf16.mxu0 0
        %1055 = vmatpush1.bf16.msra.mxu0 0
        %1056 = vmatprep.subr.bf16.mxu0 0
        %1057 = vmatpush1.bf16.msra.mxu0 0
        %1058 = vmatprep.subr.bf16.mxu0 0
        %1059 = vmatpush1.bf16.msra.mxu0 0
        %1060 = vmatprep.subr.bf16.mxu0 0
        %1061 = vmatpush1.bf16.msra.mxu0 0
        %1062 = vmatprep.subr.bf16.mxu0 0
        %1063 = vmatpush1.bf16.msra.mxu0 0
        %1064 = vmatprep.subr.bf16.mxu0 0
        %1065 = vmatpush1.bf16.msra.mxu0 0
        %1066 = vmatprep.subr.bf16.mxu0 0
        %1067 = vmatpush1.bf16.msra.mxu0 0
        %1068 = vmatprep.subr.bf16.mxu0 0
        %1069 = vmatpush1.bf16.msra.mxu0 0
        %1070 = vmatprep.subr.bf16.mxu0 0
        %1071 = vmatpush1.bf16.msra.mxu0 0
        %1072 = vmatprep.subr.bf16.mxu0 0
        %1073 = vmatpush1.bf16.msra.mxu0 0
        %1074 = vmatprep.subr.bf16.mxu0 0
        %1075 = vmatpush1.bf16.msra.mxu0 0
        %1076 = vmatprep.subr.bf16.mxu0 0
        %1077 = vmatpush1.bf16.msra.mxu0 0
        %1078 = vmatprep.mubr.bf16.mxu0 0
        %1079 = vmatmul.mubr.bf16.gmra.mrb[0].mxu0 %v1023
        %v1080 = vpop.f32.mrb[0].mxu0
        %v1081 = vadd.f32 %v948, %v1080
        %v1082 = vpop.f32.mrb[0].mxu0
        %v1083 = vpop.f32.mrb[0].mxu0
        %v1084 = vadd.f32 %v951, %v1083
        %v1085 = vpop.f32.mrb[0].mxu0
        %1086 = vmatprep.mubr.bf16.mxu0 0
        %1087 = vmatmul.mubr.bf16.gmra.mrb[0].mxu0 %v1026
        %v1088 = vpop.f32.mrb[0].mxu0
        %v1089 = vadd.f32 %v956, %v1088
        %v1090 = vpop.f32.mrb[0].mxu0
        %v1091 = vpop.f32.mrb[0].mxu0
        %v1092 = vadd.f32 %v959, %v1091
        %v1093 = vpop.f32.mrb[0].mxu0
        %1094 = vmatprep.mubr.bf16.mxu0 0
        %1095 = vmatmul.mubr.bf16.gmra.mrb[0].mxu0 %v1029
        %v1096 = vpop.f32.mrb[0].mxu0
        %v1097 = vadd.f32 %v964, %v1096
        %v1098 = vpop.f32.mrb[0].mxu0
        %v1099 = vpop.f32.mrb[0].mxu0
        %v1100 = vadd.f32 %v967, %v1099
        %v1101 = vpop.f32.mrb[0].mxu0
        %1102 = vmatprep.mubr.bf16.mxu0 0
        %1103 = vmatmul.mubr.bf16.gmra.mrb[0].mxu0 %v1032
        %v1104 = vpop.f32.mrb[0].mxu0
        %v1105 = vadd.f32 %v972, %v1104
        %v1106 = vpop.f32.mrb[0].mxu0
        %v1107 = vpop.f32.mrb[0].mxu0
        %v1108 = vadd.f32 %v975, %v1107
        %v1109 = vpop.f32.mrb[0].mxu0
        %1110 = vmatprep.mubr.bf16.mxu0 0
        %1111 = vmatmul.mubr.bf16.gmra.mrb[0].mxu0 %v1035
        %v1112 = vpop.f32.mrb[0].mxu0
        %v1113 = vadd.f32 %v980, %v1112
        %v1114 = vpop.f32.mrb[0].mxu0
        %v1115 = vpop.f32.mrb[0].mxu0
        %v1116 = vadd.f32 %v983, %v1115
        %v1117 = vpop.f32.mrb[0].mxu0
        %1118 = vmatprep.mubr.bf16.mxu0 0
        %1119 = vmatmul.mubr.bf16.gmra.mrb[0].mxu0 %v1038
        %v1120 = vpop.f32.mrb[0].mxu0
        %v1121 = vadd.f32 %v988, %v1120
        %v1122 = vpop.f32.mrb[0].mxu0
        %v1123 = vpop.f32.mrb[0].mxu0
        %v1124 = vadd.f32 %v991, %v1123
        %v1125 = vpop.f32.mrb[0].mxu0
        %1126 = vmatprep.mubr.bf16.mxu0 0
        %1127 = vmatmul.mubr.bf16.gmra.mrb[0].mxu0 %v1041
        %v1128 = vpop.f32.mrb[0].mxu0
        %v1129 = vadd.f32 %v996, %v1128
        %v1130 = vpop.f32.mrb[0].mxu0
        %v1131 = vpop.f32.mrb[0].mxu0
        %v1132 = vadd.f32 %v999, %v1131
        %v1133 = vpop.f32.mrb[0].mxu0
        %1134 = vmatprep.mubr.bf16.mxu0 0
        %1135 = vmatmul.mubr.bf16.gmra.mrb[0].mxu0 %v1044
        %v1136 = vpop.f32.mrb[0].mxu0
        %v1137 = vadd.f32 %v1004, %v1136
        %v1138 = vpop.f32.mrb[0].mxu0
        %v1139 = vpop.f32.mrb[0].mxu0
        %v1140 = vadd.f32 %v1007, %v1139
        %v1141 = vpop.f32.mrb[0].mxu0
        %1142 = vdwg.mxu0
        %s1143 = scalar_lea.vmem %s3, 32
        %v1144 = vld [vmem:[%s1143] sm:$0xf]
        %v1145 = vld [vmem:[%s1143 + $0x4] sm:$0xf]
        %v1146 = vld [vmem:[%s1143 + $0x8] sm:$0xf]
        %v1147 = vld [vmem:[%s1143 + $0xc] sm:$0xf]
        %v1152 = vunpack.c.l.b16 %v1144
        %v1153 = vunpack.c.l.b16 %v1145
        %v1154 = vunpack.c.l.b16 %v1146
        %v1155 = vunpack.c.l.b16 %v1147
        %v1156 = vpack.c.b16 %v1153, %v1152
        %v1157 = vpack.c.b16 %v1155, %v1154
        %v1161 = vsel %vm888, %v819, 0
        %v1164 = vsel %vm888, %v820, 0
        %v1167 = vsel %vm888, %v821, 0
        %v1170 = vsel %vm888, %v822, 0
        %v1173 = vsel %vm888, %v823, 0
        %v1176 = vsel %vm888, %v824, 0
        %v1179 = vsel %vm888, %v825, 0
        %v1182 = vsel %vm888, %v826, 0
        %1184 = vmatprep.subr.bf16.mxu0 0
        %1185 = vmatpush1.bf16.msra.mxu0 %v1156
        %1186 = vmatprep.subr.bf16.mxu0 0
        %1187 = vmatpush1.bf16.msra.mxu0 %v1157
        %1188 = vmatprep.subr.bf16.mxu0 0
        %1189 = vmatpush1.bf16.msra.mxu0 0
        %1190 = vmatprep.subr.bf16.mxu0 0
        %1191 = vmatpush1.bf16.msra.mxu0 0
        %1192 = vmatprep.subr.bf16.mxu0 0
        %1193 = vmatpush1.bf16.msra.mxu0 0
        %1194 = vmatprep.subr.bf16.mxu0 0
        %1195 = vmatpush1.bf16.msra.mxu0 0
        %1196 = vmatprep.subr.bf16.mxu0 0
        %1197 = vmatpush1.bf16.msra.mxu0 0
        %1198 = vmatprep.subr.bf16.mxu0 0
        %1199 = vmatpush1.bf16.msra.mxu0 0
        %1200 = vmatprep.subr.bf16.mxu0 0
        %1201 = vmatpush1.bf16.msra.mxu0 0
        %1202 = vmatprep.subr.bf16.mxu0 0
        %1203 = vmatpush1.bf16.msra.mxu0 0
        %1204 = vmatprep.subr.bf16.mxu0 0
        %1205 = vmatpush1.bf16.msra.mxu0 0
        %1206 = vmatprep.subr.bf16.mxu0 0
        %1207 = vmatpush1.bf16.msra.mxu0 0
        %1208 = vmatprep.subr.bf16.mxu0 0
        %1209 = vmatpush1.bf16.msra.mxu0 0
        %1210 = vmatprep.subr.bf16.mxu0 0
        %1211 = vmatpush1.bf16.msra.mxu0 0
        %1212 = vmatprep.subr.bf16.mxu0 0
        %1213 = vmatpush1.bf16.msra.mxu0 0
        %1214 = vmatprep.subr.bf16.mxu0 0
        %1215 = vmatpush1.bf16.msra.mxu0 0
        %1216 = vmatprep.mubr.bf16.mxu0 0
        %1217 = vmatmul.mubr.bf16.gmra.mrb[0].mxu0 %v1161
        %v1218 = vpop.f32.mrb[0].mxu0
        %v1219 = vadd.f32 0.0, %v1218
        %v1220 = vpop.f32.mrb[0].mxu0
        %v1221 = vpop.f32.mrb[0].mxu0
        %v1222 = vadd.f32 0.0, %v1221
        %v1223 = vpop.f32.mrb[0].mxu0
        %1224 = vmatprep.mubr.bf16.mxu0 0
        %1225 = vmatmul.mubr.bf16.gmra.mrb[0].mxu0 %v1164
        %v1226 = vpop.f32.mrb[0].mxu0
        %v1227 = vadd.f32 0.0, %v1226
        %v1228 = vpop.f32.mrb[0].mxu0
        %v1229 = vpop.f32.mrb[0].mxu0
        %v1230 = vadd.f32 0.0, %v1229
        %v1231 = vpop.f32.mrb[0].mxu0
        %1232 = vmatprep.mubr.bf16.mxu0 0
        %1233 = vmatmul.mubr.bf16.gmra.mrb[0].mxu0 %v1167
        %v1234 = vpop.f32.mrb[0].mxu0
        %v1235 = vadd.f32 0.0, %v1234
        %v1236 = vpop.f32.mrb[0].mxu0
        %v1237 = vpop.f32.mrb[0].mxu0
        %v1238 = vadd.f32 0.0, %v1237
        %v1239 = vpop.f32.mrb[0].mxu0
        %1240 = vmatprep.mubr.bf16.mxu0 0
        %1241 = vmatmul.mubr.bf16.gmra.mrb[0].mxu0 %v1170
        %v1242 = vpop.f32.mrb[0].mxu0
        %v1243 = vadd.f32 0.0, %v1242
        %v1244 = vpop.f32.mrb[0].mxu0
        %v1245 = vpop.f32.mrb[0].mxu0
        %v1246 = vadd.f32 0.0, %v1245
        %v1247 = vpop.f32.mrb[0].mxu0
        %1248 = vmatprep.mubr.bf16.mxu0 0
        %1249 = vmatmul.mubr.bf16.gmra.mrb[0].mxu0 %v1173
        %v1250 = vpop.f32.mrb[0].mxu0
        %v1251 = vadd.f32 0.0, %v1250
        %v1252 = vpop.f32.mrb[0].mxu0
        %v1253 = vpop.f32.mrb[0].mxu0
        %v1254 = vadd.f32 0.0, %v1253
        %v1255 = vpop.f32.mrb[0].mxu0
        %1256 = vmatprep.mubr.bf16.mxu0 0
        %1257 = vmatmul.mubr.bf16.gmra.mrb[0].mxu0 %v1176
        %v1258 = vpop.f32.mrb[0].mxu0
        %v1259 = vadd.f32 0.0, %v1258
        %v1260 = vpop.f32.mrb[0].mxu0
        %v1261 = vpop.f32.mrb[0].mxu0
        %v1262 = vadd.f32 0.0, %v1261
        %v1263 = vpop.f32.mrb[0].mxu0
        %1264 = vmatprep.mubr.bf16.mxu0 0
        %1265 = vmatmul.mubr.bf16.gmra.mrb[0].mxu0 %v1179
        %v1266 = vpop.f32.mrb[0].mxu0
        %v1267 = vadd.f32 0.0, %v1266
        %v1268 = vpop.f32.mrb[0].mxu0
        %v1269 = vpop.f32.mrb[0].mxu0
        %v1270 = vadd.f32 0.0, %v1269
        %v1271 = vpop.f32.mrb[0].mxu0
        %1272 = vmatprep.mubr.bf16.mxu0 0
        %1273 = vmatmul.mubr.bf16.gmra.mrb[0].mxu0 %v1182
        %v1274 = vpop.f32.mrb[0].mxu0
        %v1275 = vadd.f32 0.0, %v1274
        %v1276 = vpop.f32.mrb[0].mxu0
        %v1277 = vpop.f32.mrb[0].mxu0
        %v1278 = vadd.f32 0.0, %v1277
        %v1279 = vpop.f32.mrb[0].mxu0
        %1280 = vdwg.mxu0
        %v1281 = vadd.f32 %v1081, %v1219
        %v1282 = vadd.f32 %v1084, %v1222
        %v1283 = vadd.f32 %v1089, %v1227
        %v1284 = vadd.f32 %v1092, %v1230
        %v1285 = vadd.f32 %v1097, %v1235
        %v1286 = vadd.f32 %v1100, %v1238
        %v1287 = vadd.f32 %v1105, %v1243
        %v1288 = vadd.f32 %v1108, %v1246
        %v1289 = vadd.f32 %v1113, %v1251
        %v1290 = vadd.f32 %v1116, %v1254
        %v1291 = vadd.f32 %v1121, %v1259
        %v1292 = vadd.f32 %v1124, %v1262
        %v1293 = vadd.f32 %v1129, %v1267
        %v1294 = vadd.f32 %v1132, %v1270
        %v1295 = vadd.f32 %v1137, %v1275
        %v1296 = vadd.f32 %v1140, %v1278
        %v1297 = vld [vmem:[%s4] sm:$0x1]
        %v1299 = vlaneseq
        %v1300 = vshrl.u32 %v1299, 7
        %v1301 = vsub.s32 0, %v1300
        %v1302 = vrot.slane %v1297, %v1301
        %v1304 = vadd.f32 %v1281, %v1302
        %v1305 = vadd.f32 %v1282, %v1302
        %v1306 = vadd.f32 %v1283, %v1302
        %v1307 = vadd.f32 %v1284, %v1302
        %v1308 = vadd.f32 %v1285, %v1302
        %v1309 = vadd.f32 %v1286, %v1302
        %v1310 = vadd.f32 %v1287, %v1302
        %v1311 = vadd.f32 %v1288, %v1302
        %v1312 = vadd.f32 %v1289, %v1302
        %v1313 = vadd.f32 %v1290, %v1302
        %v1314 = vadd.f32 %v1291, %v1302
        %v1315 = vadd.f32 %v1292, %v1302
        %v1316 = vadd.f32 %v1293, %v1302
        %v1317 = vadd.f32 %v1294, %v1302
        %v1318 = vadd.f32 %v1295, %v1302
        %v1319 = vadd.f32 %v1296, %v1302
        %v1320 = vsel %vm888, %v1304, 0.0
        %1321 = vadd.xlane.f32.xlu0 %v1320
        %v1322 = vpop.xlane.xlu0 %1321
        %v1323 = vsel %vm888, %v1305, 0.0
        %1324 = vadd.xlane.f32.xlu0 %v1323
        %v1325 = vpop.xlane.xlu0 %1324
        %v1326 = vsel %vm888, %v1306, 0.0
        %1327 = vadd.xlane.f32.xlu0 %v1326
        %v1328 = vpop.xlane.xlu0 %1327
        %v1329 = vsel %vm888, %v1307, 0.0
        %1330 = vadd.xlane.f32.xlu0 %v1329
        %v1331 = vpop.xlane.xlu0 %1330
        %v1332 = vsel %vm888, %v1308, 0.0
        %1333 = vadd.xlane.f32.xlu0 %v1332
        %v1334 = vpop.xlane.xlu0 %1333
        %v1335 = vsel %vm888, %v1309, 0.0
        %1336 = vadd.xlane.f32.xlu0 %v1335
        %v1337 = vpop.xlane.xlu0 %1336
        %v1338 = vsel %vm888, %v1310, 0.0
        %1339 = vadd.xlane.f32.xlu0 %v1338
        %v1340 = vpop.xlane.xlu0 %1339
        %v1341 = vsel %vm888, %v1311, 0.0
        %1342 = vadd.xlane.f32.xlu0 %v1341
        %v1343 = vpop.xlane.xlu0 %1342
        %v1344 = vsel %vm888, %v1312, 0.0
        %1345 = vadd.xlane.f32.xlu0 %v1344
        %v1346 = vpop.xlane.xlu0 %1345
        %v1347 = vsel %vm888, %v1313, 0.0
        %1348 = vadd.xlane.f32.xlu0 %v1347
        %v1349 = vpop.xlane.xlu0 %1348
        %v1350 = vsel %vm888, %v1314, 0.0
        %1351 = vadd.xlane.f32.xlu0 %v1350
        %v1352 = vpop.xlane.xlu0 %1351
        %v1353 = vsel %vm888, %v1315, 0.0
        %1354 = vadd.xlane.f32.xlu0 %v1353
        %v1355 = vpop.xlane.xlu0 %1354
        %v1356 = vsel %vm888, %v1316, 0.0
        %1357 = vadd.xlane.f32.xlu0 %v1356
        %v1358 = vpop.xlane.xlu0 %1357
        %v1359 = vsel %vm888, %v1317, 0.0
        %1360 = vadd.xlane.f32.xlu0 %v1359
        %v1361 = vpop.xlane.xlu0 %1360
        %v1362 = vsel %vm888, %v1318, 0.0
        %1363 = vadd.xlane.f32.xlu0 %v1362
        %v1364 = vpop.xlane.xlu0 %1363
        %v1365 = vsel %vm888, %v1319, 0.0
        %1366 = vadd.xlane.f32.xlu0 %v1365
        %v1367 = vpop.xlane.xlu0 %1366
        %v1368 = vrcp.pop 32.0
        %v1369 = vmul.f32 %v1322, %v1368
        %v1370 = vmul.f32 %v1325, %v1368
        %v1371 = vmul.f32 %v1328, %v1368
        %v1372 = vmul.f32 %v1331, %v1368
        %v1373 = vmul.f32 %v1334, %v1368
        %v1374 = vmul.f32 %v1337, %v1368
        %v1375 = vmul.f32 %v1340, %v1368
        %v1376 = vmul.f32 %v1343, %v1368
        %v1377 = vmul.f32 %v1346, %v1368
        %v1378 = vmul.f32 %v1349, %v1368
        %v1379 = vmul.f32 %v1352, %v1368
        %v1380 = vmul.f32 %v1355, %v1368
        %v1381 = vmul.f32 %v1358, %v1368
        %v1382 = vmul.f32 %v1361, %v1368
        %v1383 = vmul.f32 %v1364, %v1368
        %v1384 = vmul.f32 %v1367, %v1368
        %v1385 = vsub.f32 %v1304, %v1369
        %v1386 = vsub.f32 %v1305, %v1370
        %v1387 = vsub.f32 %v1306, %v1371
        %v1388 = vsub.f32 %v1307, %v1372
        %v1389 = vsub.f32 %v1308, %v1373
        %v1390 = vsub.f32 %v1309, %v1374
        %v1391 = vsub.f32 %v1310, %v1375
        %v1392 = vsub.f32 %v1311, %v1376
        %v1393 = vsub.f32 %v1312, %v1377
        %v1394 = vsub.f32 %v1313, %v1378
        %v1395 = vsub.f32 %v1314, %v1379
        %v1396 = vsub.f32 %v1315, %v1380
        %v1397 = vsub.f32 %v1316, %v1381
        %v1398 = vsub.f32 %v1317, %v1382
        %v1399 = vsub.f32 %v1318, %v1383
        %v1400 = vsub.f32 %v1319, %v1384
        %v1401 = vmul.f32 %v1385, %v1385
        %v1402 = vmul.f32 %v1386, %v1386
        %v1403 = vmul.f32 %v1387, %v1387
        %v1404 = vmul.f32 %v1388, %v1388
        %v1405 = vmul.f32 %v1389, %v1389
        %v1406 = vmul.f32 %v1390, %v1390
        %v1407 = vmul.f32 %v1391, %v1391
        %v1408 = vmul.f32 %v1392, %v1392
        %v1409 = vmul.f32 %v1393, %v1393
        %v1410 = vmul.f32 %v1394, %v1394
        %v1411 = vmul.f32 %v1395, %v1395
        %v1412 = vmul.f32 %v1396, %v1396
        %v1413 = vmul.f32 %v1397, %v1397
        %v1414 = vmul.f32 %v1398, %v1398
        %v1415 = vmul.f32 %v1399, %v1399
        %v1416 = vmul.f32 %v1400, %v1400
        %v1417 = vsel %vm888, %v1401, 0.0
        %1418 = vadd.xlane.f32.xlu0 %v1417
        %v1419 = vpop.xlane.xlu0 %1418
        %v1420 = vsel %vm888, %v1402, 0.0
        %1421 = vadd.xlane.f32.xlu0 %v1420
        %v1422 = vpop.xlane.xlu0 %1421
        %v1423 = vsel %vm888, %v1403, 0.0
        %1424 = vadd.xlane.f32.xlu0 %v1423
        %v1425 = vpop.xlane.xlu0 %1424
        %v1426 = vsel %vm888, %v1404, 0.0
        %1427 = vadd.xlane.f32.xlu0 %v1426
        %v1428 = vpop.xlane.xlu0 %1427
        %v1429 = vsel %vm888, %v1405, 0.0
        %1430 = vadd.xlane.f32.xlu0 %v1429
        %v1431 = vpop.xlane.xlu0 %1430
        %v1432 = vsel %vm888, %v1406, 0.0
        %1433 = vadd.xlane.f32.xlu0 %v1432
        %v1434 = vpop.xlane.xlu0 %1433
        %v1435 = vsel %vm888, %v1407, 0.0
        %1436 = vadd.xlane.f32.xlu0 %v1435
        %v1437 = vpop.xlane.xlu0 %1436
        %v1438 = vsel %vm888, %v1408, 0.0
        %1439 = vadd.xlane.f32.xlu0 %v1438
        %v1440 = vpop.xlane.xlu0 %1439
        %v1441 = vsel %vm888, %v1409, 0.0
        %1442 = vadd.xlane.f32.xlu0 %v1441
        %v1443 = vpop.xlane.xlu0 %1442
        %v1444 = vsel %vm888, %v1410, 0.0
        %1445 = vadd.xlane.f32.xlu0 %v1444
        %v1446 = vpop.xlane.xlu0 %1445
        %v1447 = vsel %vm888, %v1411, 0.0
        %1448 = vadd.xlane.f32.xlu0 %v1447
        %v1449 = vpop.xlane.xlu0 %1448
        %v1450 = vsel %vm888, %v1412, 0.0
        %1451 = vadd.xlane.f32.xlu0 %v1450
        %v1452 = vpop.xlane.xlu0 %1451
        %v1453 = vsel %vm888, %v1413, 0.0
        %1454 = vadd.xlane.f32.xlu0 %v1453
        %v1455 = vpop.xlane.xlu0 %1454
        %v1456 = vsel %vm888, %v1414, 0.0
        %1457 = vadd.xlane.f32.xlu0 %v1456
        %v1458 = vpop.xlane.xlu0 %1457
        %v1459 = vsel %vm888, %v1415, 0.0
        %1460 = vadd.xlane.f32.xlu0 %v1459
        %v1461 = vpop.xlane.xlu0 %1460
        %v1462 = vsel %vm888, %v1416, 0.0
        %1463 = vadd.xlane.f32.xlu0 %v1462
        %v1464 = vpop.xlane.xlu0 %1463
        %v1465 = vmul.f32 %v1419, %v1368
        %v1466 = vmul.f32 %v1422, %v1368
        %v1467 = vmul.f32 %v1425, %v1368
        %v1468 = vmul.f32 %v1428, %v1368
        %v1469 = vmul.f32 %v1431, %v1368
        %v1470 = vmul.f32 %v1434, %v1368
        %v1471 = vmul.f32 %v1437, %v1368
        %v1472 = vmul.f32 %v1440, %v1368
        %v1473 = vmul.f32 %v1443, %v1368
        %v1474 = vmul.f32 %v1446, %v1368
        %v1475 = vmul.f32 %v1449, %v1368
        %v1476 = vmul.f32 %v1452, %v1368
        %v1477 = vmul.f32 %v1455, %v1368
        %v1478 = vmul.f32 %v1458, %v1368
        %v1479 = vmul.f32 %v1461, %v1368
        %v1480 = vmul.f32 %v1464, %v1368
        %v1481 = vadd.f32 %v1465, 1e-05
        %v1482 = vadd.f32 %v1466, 1e-05
        %v1483 = vadd.f32 %v1467, 1e-05
        %v1484 = vadd.f32 %v1468, 1e-05
        %v1485 = vadd.f32 %v1469, 1e-05
        %v1486 = vadd.f32 %v1470, 1e-05
        %v1487 = vadd.f32 %v1471, 1e-05
        %v1488 = vadd.f32 %v1472, 1e-05
        %v1489 = vadd.f32 %v1473, 1e-05
        %v1490 = vadd.f32 %v1474, 1e-05
        %v1491 = vadd.f32 %v1475, 1e-05
        %v1492 = vadd.f32 %v1476, 1e-05
        %v1493 = vadd.f32 %v1477, 1e-05
        %v1494 = vadd.f32 %v1478, 1e-05
        %v1495 = vadd.f32 %v1479, 1e-05
        %v1496 = vadd.f32 %v1480, 1e-05
        %v1497 = vrsqrt.pop %v1481
        %v1498 = vrsqrt.pop %v1482
        %v1499 = vrsqrt.pop %v1483
        %v1500 = vrsqrt.pop %v1484
        %v1501 = vrsqrt.pop %v1485
        %v1502 = vrsqrt.pop %v1486
        %v1503 = vrsqrt.pop %v1487
        %v1504 = vrsqrt.pop %v1488
        %v1505 = vrsqrt.pop %v1489
        %v1506 = vrsqrt.pop %v1490
        %v1507 = vrsqrt.pop %v1491
        %v1508 = vrsqrt.pop %v1492
        %v1509 = vrsqrt.pop %v1493
        %v1510 = vrsqrt.pop %v1494
        %v1511 = vrsqrt.pop %v1495
        %v1512 = vrsqrt.pop %v1496
        %v1513 = vmul.f32 %v1385, %v1497
        %v1514 = vmul.f32 %v1386, %v1498
        %v1515 = vmul.f32 %v1387, %v1499
        %v1516 = vmul.f32 %v1388, %v1500
        %v1517 = vmul.f32 %v1389, %v1501
        %v1518 = vmul.f32 %v1390, %v1502
        %v1519 = vmul.f32 %v1391, %v1503
        %v1520 = vmul.f32 %v1392, %v1504
        %v1521 = vmul.f32 %v1393, %v1505
        %v1522 = vmul.f32 %v1394, %v1506
        %v1523 = vmul.f32 %v1395, %v1507
        %v1524 = vmul.f32 %v1396, %v1508
        %v1525 = vmul.f32 %v1397, %v1509
        %v1526 = vmul.f32 %v1398, %v1510
        %v1527 = vmul.f32 %v1399, %v1511
        %v1528 = vmul.f32 %v1400, %v1512
        %v1529 = vld [vmem:[%s5] sm:$0x1]
        %v1531 = vlaneseq
        %v1532 = vshrl.u32 %v1531, 7
        %v1533 = vsub.s32 0, %v1532
        %v1534 = vrot.slane %v1529, %v1533
        %v1536 = vmul.f32 %v1513, %v1534
        %v1537 = vmul.f32 %v1514, %v1534
        %v1538 = vmul.f32 %v1515, %v1534
        %v1539 = vmul.f32 %v1516, %v1534
        %v1540 = vmul.f32 %v1517, %v1534
        %v1541 = vmul.f32 %v1518, %v1534
        %v1542 = vmul.f32 %v1519, %v1534
        %v1543 = vmul.f32 %v1520, %v1534
        %v1544 = vmul.f32 %v1521, %v1534
        %v1545 = vmul.f32 %v1522, %v1534
        %v1546 = vmul.f32 %v1523, %v1534
        %v1547 = vmul.f32 %v1524, %v1534
        %v1548 = vmul.f32 %v1525, %v1534
        %v1549 = vmul.f32 %v1526, %v1534
        %v1550 = vmul.f32 %v1527, %v1534
        %v1551 = vmul.f32 %v1528, %v1534
        %v1552 = vld [vmem:[%s6] sm:$0x1]
        %v1554 = vlaneseq
        %v1555 = vshrl.u32 %v1554, 7
        %v1556 = vsub.s32 0, %v1555
        %v1557 = vrot.slane %v1552, %v1556
        %v1559 = vadd.f32 %v1536, %v1557
        %v1560 = vadd.f32 %v1537, %v1557
        %v1561 = vadd.f32 %v1538, %v1557
        %v1562 = vadd.f32 %v1539, %v1557
        %v1563 = vadd.f32 %v1540, %v1557
        %v1564 = vadd.f32 %v1541, %v1557
        %v1565 = vadd.f32 %v1542, %v1557
        %v1566 = vadd.f32 %v1543, %v1557
        %v1567 = vadd.f32 %v1544, %v1557
        %v1568 = vadd.f32 %v1545, %v1557
        %v1569 = vadd.f32 %v1546, %v1557
        %v1570 = vadd.f32 %v1547, %v1557
        %v1571 = vadd.f32 %v1548, %v1557
        %v1572 = vadd.f32 %v1549, %v1557
        %v1573 = vadd.f32 %v1550, %v1557
        %v1574 = vadd.f32 %v1551, %v1557
        %v1575 = vmax.f32 %v1559, 0.0
        %v1576 = vmax.f32 %v1560, 0.0
        %v1577 = vmax.f32 %v1561, 0.0
        %v1578 = vmax.f32 %v1562, 0.0
        %v1579 = vmax.f32 %v1563, 0.0
        %v1580 = vmax.f32 %v1564, 0.0
        %v1581 = vmax.f32 %v1565, 0.0
        %v1582 = vmax.f32 %v1566, 0.0
        %v1583 = vmax.f32 %v1567, 0.0
        %v1584 = vmax.f32 %v1568, 0.0
        %v1585 = vmax.f32 %v1569, 0.0
        %v1586 = vmax.f32 %v1570, 0.0
        %v1587 = vmax.f32 %v1571, 0.0
        %v1588 = vmax.f32 %v1572, 0.0
        %v1589 = vmax.f32 %v1573, 0.0
        %v1590 = vmax.f32 %v1574, 0.0
        %v1591 = vpack.c.bf16 %v1576, %v1575
        %v1592 = vpack.c.bf16 %v1578, %v1577
        %v1593 = vpack.c.bf16 %v1580, %v1579
        %v1594 = vpack.c.bf16 %v1582, %v1581
        %v1595 = vpack.c.bf16 %v1584, %v1583
        %v1596 = vpack.c.bf16 %v1586, %v1585
        %v1597 = vpack.c.bf16 %v1588, %v1587
        %v1598 = vpack.c.bf16 %v1590, %v1589
        %v1599 = vrot.slane %v1575, 7
        %v1600 = vrot.slane %v1576, 7
        %v1601 = vrot.slane %v1577, 7
        %v1602 = vrot.slane %v1578, 7
        %v1603 = vrot.slane %v1579, 7
        %v1604 = vrot.slane %v1580, 7
        %v1605 = vrot.slane %v1581, 7
        %v1606 = vrot.slane %v1582, 7
        %v1607 = vrot.slane %v1583, 7
        %v1608 = vrot.slane %v1584, 7
        %v1609 = vrot.slane %v1585, 7
        %v1610 = vrot.slane %v1586, 7
        %v1611 = vrot.slane %v1587, 7
        %v1612 = vrot.slane %v1588, 7
        %v1613 = vrot.slane %v1589, 7
        %v1614 = vrot.slane %v1590, 7
        %v1615 = vsel %vm569, %v1613, %v1614
        %v1616 = vsel %vm569, %v1612, %v1613
        %v1617 = vsel %vm569, %v1611, %v1612
        %v1618 = vsel %vm569, %v1610, %v1611
        %v1619 = vsel %vm569, %v1609, %v1610
        %v1620 = vsel %vm569, %v1608, %v1609
        %v1621 = vsel %vm569, %v1607, %v1608
        %v1622 = vsel %vm569, %v1606, %v1607
        %v1623 = vsel %vm569, %v1605, %v1606
        %v1624 = vsel %vm569, %v1604, %v1605
        %v1625 = vsel %vm569, %v1603, %v1604
        %v1626 = vsel %vm569, %v1602, %v1603
        %v1627 = vsel %vm569, %v1601, %v1602
        %v1628 = vsel %vm569, %v1600, %v1601
        %v1629 = vsel %vm569, %v1599, %v1600
        %v1630 = vsel %vm569, %v1614, %v1599
        %v1631 = vmul.f32 %v589, %v1630
        %v1632 = vmul.f32 %v594, %v1629
        %v1633 = vmul.f32 %v599, %v1628
        %v1634 = vmul.f32 %v604, %v1627
        %v1635 = vmul.f32 %v609, %v1626
        %v1636 = vmul.f32 %v614, %v1625
        %v1637 = vmul.f32 %v619, %v1624
        %v1638 = vmul.f32 %v624, %v1623
        %v1639 = vmul.f32 %v629, %v1622
        %v1640 = vmul.f32 %v634, %v1621
        %v1641 = vmul.f32 %v639, %v1620
        %v1642 = vmul.f32 %v644, %v1619
        %v1643 = vmul.f32 %v649, %v1618
        %v1644 = vmul.f32 %v654, %v1617
        %v1645 = vmul.f32 %v659, %v1616
        %v1646 = vmul.f32 %v664, %v1615
        %v1647 = vpack.c.bf16 %v1632, %v1631
        %v1648 = vpack.c.bf16 %v1634, %v1633
        %v1649 = vpack.c.bf16 %v1636, %v1635
        %v1650 = vpack.c.bf16 %v1638, %v1637
        %v1651 = vpack.c.bf16 %v1640, %v1639
        %v1652 = vpack.c.bf16 %v1642, %v1641
        %v1653 = vpack.c.bf16 %v1644, %v1643
        %v1654 = vpack.c.bf16 %v1646, %v1645
        %v1655 = vrot.slane %v1575, 1
        %v1656 = vrot.slane %v1576, 1
        %v1657 = vrot.slane %v1577, 1
        %v1658 = vrot.slane %v1578, 1
        %v1659 = vrot.slane %v1579, 1
        %v1660 = vrot.slane %v1580, 1
        %v1661 = vrot.slane %v1581, 1
        %v1662 = vrot.slane %v1582, 1
        %v1663 = vrot.slane %v1583, 1
        %v1664 = vrot.slane %v1584, 1
        %v1665 = vrot.slane %v1585, 1
        %v1666 = vrot.slane %v1586, 1
        %v1667 = vrot.slane %v1587, 1
        %v1668 = vrot.slane %v1588, 1
        %v1669 = vrot.slane %v1589, 1
        %v1670 = vrot.slane %v1590, 1
        %v1671 = vsel %vm706, %v1669, %v1670
        %v1672 = vsel %vm706, %v1668, %v1669
        %v1673 = vsel %vm706, %v1667, %v1668
        %v1674 = vsel %vm706, %v1666, %v1667
        %v1675 = vsel %vm706, %v1665, %v1666
        %v1676 = vsel %vm706, %v1664, %v1665
        %v1677 = vsel %vm706, %v1663, %v1664
        %v1678 = vsel %vm706, %v1662, %v1663
        %v1679 = vsel %vm706, %v1661, %v1662
        %v1680 = vsel %vm706, %v1660, %v1661
        %v1681 = vsel %vm706, %v1659, %v1660
        %v1682 = vsel %vm706, %v1658, %v1659
        %v1683 = vsel %vm706, %v1657, %v1658
        %v1684 = vsel %vm706, %v1656, %v1657
        %v1685 = vsel %vm706, %v1655, %v1656
        %v1686 = vsel %vm706, %v1670, %v1655
        %v1687 = vmul.f32 %v726, %v1685
        %v1688 = vmul.f32 %v731, %v1684
        %v1689 = vmul.f32 %v736, %v1683
        %v1690 = vmul.f32 %v741, %v1682
        %v1691 = vmul.f32 %v746, %v1681
        %v1692 = vmul.f32 %v751, %v1680
        %v1693 = vmul.f32 %v756, %v1679
        %v1694 = vmul.f32 %v761, %v1678
        %v1695 = vmul.f32 %v766, %v1677
        %v1696 = vmul.f32 %v771, %v1676
        %v1697 = vmul.f32 %v776, %v1675
        %v1698 = vmul.f32 %v781, %v1674
        %v1699 = vmul.f32 %v786, %v1673
        %v1700 = vmul.f32 %v791, %v1672
        %v1701 = vmul.f32 %v796, %v1671
        %v1702 = vmul.f32 %v801, %v1686
        %v1703 = vpack.c.bf16 %v1688, %v1687
        %v1704 = vpack.c.bf16 %v1690, %v1689
        %v1705 = vpack.c.bf16 %v1692, %v1691
        %v1706 = vpack.c.bf16 %v1694, %v1693
        %v1707 = vpack.c.bf16 %v1696, %v1695
        %v1708 = vpack.c.bf16 %v1698, %v1697
        %v1709 = vpack.c.bf16 %v1700, %v1699
        %v1710 = vpack.c.bf16 %v1702, %v1701
        %v1711 = vld [vmem:[%s7] sm:$0xf]
        %v1712 = vld [vmem:[%s7 + $0x4] sm:$0xf]
        %v1713 = vld [vmem:[%s7 + $0x8] sm:$0xf]
        %v1714 = vld [vmem:[%s7 + $0xc] sm:$0xf]
        %s1715 = scalar_lea.vmem %s7, 16
        %v1716 = vld [vmem:[%s1715] sm:$0xf]
        %v1717 = vld [vmem:[%s1715 + $0x4] sm:$0xf]
        %v1718 = vld [vmem:[%s1715 + $0x8] sm:$0xf]
        %v1719 = vld [vmem:[%s1715 + $0xc] sm:$0xf]
        %v1724 = vunpack.c.l.b16 %v1716
        %v1725 = vunpack.c.l.b16 %v1717
        %v1726 = vunpack.c.l.b16 %v1718
        %v1727 = vunpack.c.l.b16 %v1719
        %v1728 = vpack.c.b16 %v1725, %v1724
        %v1729 = vpack.c.b16 %v1727, %v1726
        %v1733 = vsel %vm888, %v1591, 0
        %v1736 = vsel %vm888, %v1592, 0
        %v1739 = vsel %vm888, %v1593, 0
        %v1742 = vsel %vm888, %v1594, 0
        %v1745 = vsel %vm888, %v1595, 0
        %v1748 = vsel %vm888, %v1596, 0
        %v1751 = vsel %vm888, %v1597, 0
        %v1754 = vsel %vm888, %v1598, 0
        %1756 = vmatprep.subr.bf16.mxu0 0
        %1757 = vmatpush1.bf16.msra.mxu0 %v1728
        %1758 = vmatprep.subr.bf16.mxu0 0
        %1759 = vmatpush1.bf16.msra.mxu0 %v1729
        %1760 = vmatprep.subr.bf16.mxu0 0
        %1761 = vmatpush1.bf16.msra.mxu0 0
        %1762 = vmatprep.subr.bf16.mxu0 0
        %1763 = vmatpush1.bf16.msra.mxu0 0
        %1764 = vmatprep.subr.bf16.mxu0 0
        %1765 = vmatpush1.bf16.msra.mxu0 0
        %1766 = vmatprep.subr.bf16.mxu0 0
        %1767 = vmatpush1.bf16.msra.mxu0 0
        %1768 = vmatprep.subr.bf16.mxu0 0
        %1769 = vmatpush1.bf16.msra.mxu0 0
        %1770 = vmatprep.subr.bf16.mxu0 0
        %1771 = vmatpush1.bf16.msra.mxu0 0
        %1772 = vmatprep.subr.bf16.mxu0 0
        %1773 = vmatpush1.bf16.msra.mxu0 0
        %1774 = vmatprep.subr.bf16.mxu0 0
        %1775 = vmatpush1.bf16.msra.mxu0 0
        %1776 = vmatprep.subr.bf16.mxu0 0
        %1777 = vmatpush1.bf16.msra.mxu0 0
        %1778 = vmatprep.subr.bf16.mxu0 0
        %1779 = vmatpush1.bf16.msra.mxu0 0
        %1780 = vmatprep.subr.bf16.mxu0 0
        %1781 = vmatpush1.bf16.msra.mxu0 0
        %1782 = vmatprep.subr.bf16.mxu0 0
        %1783 = vmatpush1.bf16.msra.mxu0 0
        %1784 = vmatprep.subr.bf16.mxu0 0
        %1785 = vmatpush1.bf16.msra.mxu0 0
        %1786 = vmatprep.subr.bf16.mxu0 0
        %1787 = vmatpush1.bf16.msra.mxu0 0
        %1788 = vmatprep.mubr.bf16.mxu0 0
        %1789 = vmatmul.mubr.bf16.gmra.mrb[0].mxu0 %v1733
        %v1790 = vpop.f32.mrb[0].mxu0
        %v1791 = vadd.f32 0.0, %v1790
        %v1792 = vpop.f32.mrb[0].mxu0
        %v1793 = vpop.f32.mrb[0].mxu0
        %v1794 = vadd.f32 0.0, %v1793
        %v1795 = vpop.f32.mrb[0].mxu0
        %1796 = vmatprep.mubr.bf16.mxu0 0
        %1797 = vmatmul.mubr.bf16.gmra.mrb[0].mxu0 %v1736
        %v1798 = vpop.f32.mrb[0].mxu0
        %v1799 = vadd.f32 0.0, %v1798
        %v1800 = vpop.f32.mrb[0].mxu0
        %v1801 = vpop.f32.mrb[0].mxu0
        %v1802 = vadd.f32 0.0, %v1801
        %v1803 = vpop.f32.mrb[0].mxu0
        %1804 = vmatprep.mubr.bf16.mxu0 0
        %1805 = vmatmul.mubr.bf16.gmra.mrb[0].mxu0 %v1739
        %v1806 = vpop.f32.mrb[0].mxu0
        %v1807 = vadd.f32 0.0, %v1806
        %v1808 = vpop.f32.mrb[0].mxu0
        %v1809 = vpop.f32.mrb[0].mxu0
        %v1810 = vadd.f32 0.0, %v1809
        %v1811 = vpop.f32.mrb[0].mxu0
        %1812 = vmatprep.mubr.bf16.mxu0 0
        %1813 = vmatmul.mubr.bf16.gmra.mrb[0].mxu0 %v1742
        %v1814 = vpop.f32.mrb[0].mxu0
        %v1815 = vadd.f32 0.0, %v1814
        %v1816 = vpop.f32.mrb[0].mxu0
        %v1817 = vpop.f32.mrb[0].mxu0
        %v1818 = vadd.f32 0.0, %v1817
        %v1819 = vpop.f32.mrb[0].mxu0
        %1820 = vmatprep.mubr.bf16.mxu0 0
        %1821 = vmatmul.mubr.bf16.gmra.mrb[0].mxu0 %v1745
        %v1822 = vpop.f32.mrb[0].mxu0
        %v1823 = vadd.f32 0.0, %v1822
        %v1824 = vpop.f32.mrb[0].mxu0
        %v1825 = vpop.f32.mrb[0].mxu0
        %v1826 = vadd.f32 0.0, %v1825
        %v1827 = vpop.f32.mrb[0].mxu0
        %1828 = vmatprep.mubr.bf16.mxu0 0
        %1829 = vmatmul.mubr.bf16.gmra.mrb[0].mxu0 %v1748
        %v1830 = vpop.f32.mrb[0].mxu0
        %v1831 = vadd.f32 0.0, %v1830
        %v1832 = vpop.f32.mrb[0].mxu0
        %v1833 = vpop.f32.mrb[0].mxu0
        %v1834 = vadd.f32 0.0, %v1833
        %v1835 = vpop.f32.mrb[0].mxu0
        %1836 = vmatprep.mubr.bf16.mxu0 0
        %1837 = vmatmul.mubr.bf16.gmra.mrb[0].mxu0 %v1751
        %v1838 = vpop.f32.mrb[0].mxu0
        %v1839 = vadd.f32 0.0, %v1838
        %v1840 = vpop.f32.mrb[0].mxu0
        %v1841 = vpop.f32.mrb[0].mxu0
        %v1842 = vadd.f32 0.0, %v1841
        %v1843 = vpop.f32.mrb[0].mxu0
        %1844 = vmatprep.mubr.bf16.mxu0 0
        %1845 = vmatmul.mubr.bf16.gmra.mrb[0].mxu0 %v1754
        %v1846 = vpop.f32.mrb[0].mxu0
        %v1847 = vadd.f32 0.0, %v1846
        %v1848 = vpop.f32.mrb[0].mxu0
        %v1849 = vpop.f32.mrb[0].mxu0
        %v1850 = vadd.f32 0.0, %v1849
        %v1851 = vpop.f32.mrb[0].mxu0
        %1852 = vdwg.mxu0
        %v1857 = vunpack.c.l.b16 %v1711
        %v1858 = vunpack.c.l.b16 %v1712
        %v1859 = vunpack.c.l.b16 %v1713
        %v1860 = vunpack.c.l.b16 %v1714
        %v1861 = vpack.c.b16 %v1858, %v1857
        %v1862 = vpack.c.b16 %v1860, %v1859
        %v1866 = vsel %vm888, %v1647, 0
        %v1869 = vsel %vm888, %v1648, 0
        %v1872 = vsel %vm888, %v1649, 0
        %v1875 = vsel %vm888, %v1650, 0
        %v1878 = vsel %vm888, %v1651, 0
        %v1881 = vsel %vm888, %v1652, 0
        %v1884 = vsel %vm888, %v1653, 0
        %v1887 = vsel %vm888, %v1654, 0
        %1889 = vmatprep.subr.bf16.mxu0 0
        %1890 = vmatpush1.bf16.msra.mxu0 %v1861
        %1891 = vmatprep.subr.bf16.mxu0 0
        %1892 = vmatpush1.bf16.msra.mxu0 %v1862
        %1893 = vmatprep.subr.bf16.mxu0 0
        %1894 = vmatpush1.bf16.msra.mxu0 0
        %1895 = vmatprep.subr.bf16.mxu0 0
        %1896 = vmatpush1.bf16.msra.mxu0 0
        %1897 = vmatprep.subr.bf16.mxu0 0
        %1898 = vmatpush1.bf16.msra.mxu0 0
        %1899 = vmatprep.subr.bf16.mxu0 0
        %1900 = vmatpush1.bf16.msra.mxu0 0
        %1901 = vmatprep.subr.bf16.mxu0 0
        %1902 = vmatpush1.bf16.msra.mxu0 0
        %1903 = vmatprep.subr.bf16.mxu0 0
        %1904 = vmatpush1.bf16.msra.mxu0 0
        %1905 = vmatprep.subr.bf16.mxu0 0
        %1906 = vmatpush1.bf16.msra.mxu0 0
        %1907 = vmatprep.subr.bf16.mxu0 0
        %1908 = vmatpush1.bf16.msra.mxu0 0
        %1909 = vmatprep.subr.bf16.mxu0 0
        %1910 = vmatpush1.bf16.msra.mxu0 0
        %1911 = vmatprep.subr.bf16.mxu0 0
        %1912 = vmatpush1.bf16.msra.mxu0 0
        %1913 = vmatprep.subr.bf16.mxu0 0
        %1914 = vmatpush1.bf16.msra.mxu0 0
        %1915 = vmatprep.subr.bf16.mxu0 0
        %1916 = vmatpush1.bf16.msra.mxu0 0
        %1917 = vmatprep.subr.bf16.mxu0 0
        %1918 = vmatpush1.bf16.msra.mxu0 0
        %1919 = vmatprep.subr.bf16.mxu0 0
        %1920 = vmatpush1.bf16.msra.mxu0 0
        %1921 = vmatprep.mubr.bf16.mxu0 0
        %1922 = vmatmul.mubr.bf16.gmra.mrb[0].mxu0 %v1866
        %v1923 = vpop.f32.mrb[0].mxu0
        %v1924 = vadd.f32 %v1791, %v1923
        %v1925 = vpop.f32.mrb[0].mxu0
        %v1926 = vpop.f32.mrb[0].mxu0
        %v1927 = vadd.f32 %v1794, %v1926
        %v1928 = vpop.f32.mrb[0].mxu0
        %1929 = vmatprep.mubr.bf16.mxu0 0
        %1930 = vmatmul.mubr.bf16.gmra.mrb[0].mxu0 %v1869
        %v1931 = vpop.f32.mrb[0].mxu0
        %v1932 = vadd.f32 %v1799, %v1931
        %v1933 = vpop.f32.mrb[0].mxu0
        %v1934 = vpop.f32.mrb[0].mxu0
        %v1935 = vadd.f32 %v1802, %v1934
        %v1936 = vpop.f32.mrb[0].mxu0
        %1937 = vmatprep.mubr.bf16.mxu0 0
        %1938 = vmatmul.mubr.bf16.gmra.mrb[0].mxu0 %v1872
        %v1939 = vpop.f32.mrb[0].mxu0
        %v1940 = vadd.f32 %v1807, %v1939
        %v1941 = vpop.f32.mrb[0].mxu0
        %v1942 = vpop.f32.mrb[0].mxu0
        %v1943 = vadd.f32 %v1810, %v1942
        %v1944 = vpop.f32.mrb[0].mxu0
        %1945 = vmatprep.mubr.bf16.mxu0 0
        %1946 = vmatmul.mubr.bf16.gmra.mrb[0].mxu0 %v1875
        %v1947 = vpop.f32.mrb[0].mxu0
        %v1948 = vadd.f32 %v1815, %v1947
        %v1949 = vpop.f32.mrb[0].mxu0
        %v1950 = vpop.f32.mrb[0].mxu0
        %v1951 = vadd.f32 %v1818, %v1950
        %v1952 = vpop.f32.mrb[0].mxu0
        %1953 = vmatprep.mubr.bf16.mxu0 0
        %1954 = vmatmul.mubr.bf16.gmra.mrb[0].mxu0 %v1878
        %v1955 = vpop.f32.mrb[0].mxu0
        %v1956 = vadd.f32 %v1823, %v1955
        %v1957 = vpop.f32.mrb[0].mxu0
        %v1958 = vpop.f32.mrb[0].mxu0
        %v1959 = vadd.f32 %v1826, %v1958
        %v1960 = vpop.f32.mrb[0].mxu0
        %1961 = vmatprep.mubr.bf16.mxu0 0
        %1962 = vmatmul.mubr.bf16.gmra.mrb[0].mxu0 %v1881
        %v1963 = vpop.f32.mrb[0].mxu0
        %v1964 = vadd.f32 %v1831, %v1963
        %v1965 = vpop.f32.mrb[0].mxu0
        %v1966 = vpop.f32.mrb[0].mxu0
        %v1967 = vadd.f32 %v1834, %v1966
        %v1968 = vpop.f32.mrb[0].mxu0
        %1969 = vmatprep.mubr.bf16.mxu0 0
        %1970 = vmatmul.mubr.bf16.gmra.mrb[0].mxu0 %v1884
        %v1971 = vpop.f32.mrb[0].mxu0
        %v1972 = vadd.f32 %v1839, %v1971
        %v1973 = vpop.f32.mrb[0].mxu0
        %v1974 = vpop.f32.mrb[0].mxu0
        %v1975 = vadd.f32 %v1842, %v1974
        %v1976 = vpop.f32.mrb[0].mxu0
        %1977 = vmatprep.mubr.bf16.mxu0 0
        %1978 = vmatmul.mubr.bf16.gmra.mrb[0].mxu0 %v1887
        %v1979 = vpop.f32.mrb[0].mxu0
        %v1980 = vadd.f32 %v1847, %v1979
        %v1981 = vpop.f32.mrb[0].mxu0
        %v1982 = vpop.f32.mrb[0].mxu0
        %v1983 = vadd.f32 %v1850, %v1982
        %v1984 = vpop.f32.mrb[0].mxu0
        %1985 = vdwg.mxu0
        %s1986 = scalar_lea.vmem %s7, 32
        %v1987 = vld [vmem:[%s1986] sm:$0xf]
        %v1988 = vld [vmem:[%s1986 + $0x4] sm:$0xf]
        %v1989 = vld [vmem:[%s1986 + $0x8] sm:$0xf]
        %v1990 = vld [vmem:[%s1986 + $0xc] sm:$0xf]
        %v1995 = vunpack.c.l.b16 %v1987
        %v1996 = vunpack.c.l.b16 %v1988
        %v1997 = vunpack.c.l.b16 %v1989
        %v1998 = vunpack.c.l.b16 %v1990
        %v1999 = vpack.c.b16 %v1996, %v1995
        %v2000 = vpack.c.b16 %v1998, %v1997
        %v2004 = vsel %vm888, %v1703, 0
        %v2007 = vsel %vm888, %v1704, 0
        %v2010 = vsel %vm888, %v1705, 0
        %v2013 = vsel %vm888, %v1706, 0
        %v2016 = vsel %vm888, %v1707, 0
        %v2019 = vsel %vm888, %v1708, 0
        %v2022 = vsel %vm888, %v1709, 0
        %v2025 = vsel %vm888, %v1710, 0
        %2027 = vmatprep.subr.bf16.mxu0 0
        %2028 = vmatpush1.bf16.msra.mxu0 %v1999
        %2029 = vmatprep.subr.bf16.mxu0 0
        %2030 = vmatpush1.bf16.msra.mxu0 %v2000
        %2031 = vmatprep.subr.bf16.mxu0 0
        %2032 = vmatpush1.bf16.msra.mxu0 0
        %2033 = vmatprep.subr.bf16.mxu0 0
        %2034 = vmatpush1.bf16.msra.mxu0 0
        %2035 = vmatprep.subr.bf16.mxu0 0
        %2036 = vmatpush1.bf16.msra.mxu0 0
        %2037 = vmatprep.subr.bf16.mxu0 0
        %2038 = vmatpush1.bf16.msra.mxu0 0
        %2039 = vmatprep.subr.bf16.mxu0 0
        %2040 = vmatpush1.bf16.msra.mxu0 0
        %2041 = vmatprep.subr.bf16.mxu0 0
        %2042 = vmatpush1.bf16.msra.mxu0 0
        %2043 = vmatprep.subr.bf16.mxu0 0
        %2044 = vmatpush1.bf16.msra.mxu0 0
        %2045 = vmatprep.subr.bf16.mxu0 0
        %2046 = vmatpush1.bf16.msra.mxu0 0
        %2047 = vmatprep.subr.bf16.mxu0 0
        %2048 = vmatpush1.bf16.msra.mxu0 0
        %2049 = vmatprep.subr.bf16.mxu0 0
        %2050 = vmatpush1.bf16.msra.mxu0 0
        %2051 = vmatprep.subr.bf16.mxu0 0
        %2052 = vmatpush1.bf16.msra.mxu0 0
        %2053 = vmatprep.subr.bf16.mxu0 0
        %2054 = vmatpush1.bf16.msra.mxu0 0
        %2055 = vmatprep.subr.bf16.mxu0 0
        %2056 = vmatpush1.bf16.msra.mxu0 0
        %2057 = vmatprep.subr.bf16.mxu0 0
        %2058 = vmatpush1.bf16.msra.mxu0 0
        %2059 = vmatprep.mubr.bf16.mxu0 0
        %2060 = vmatmul.mubr.bf16.gmra.mrb[0].mxu0 %v2004
        %v2061 = vpop.f32.mrb[0].mxu0
        %v2062 = vadd.f32 0.0, %v2061
        %v2063 = vpop.f32.mrb[0].mxu0
        %v2064 = vpop.f32.mrb[0].mxu0
        %v2065 = vadd.f32 0.0, %v2064
        %v2066 = vpop.f32.mrb[0].mxu0
        %2067 = vmatprep.mubr.bf16.mxu0 0
        %2068 = vmatmul.mubr.bf16.gmra.mrb[0].mxu0 %v2007
        %v2069 = vpop.f32.mrb[0].mxu0
        %v2070 = vadd.f32 0.0, %v2069
        %v2071 = vpop.f32.mrb[0].mxu0
        %v2072 = vpop.f32.mrb[0].mxu0
        %v2073 = vadd.f32 0.0, %v2072
        %v2074 = vpop.f32.mrb[0].mxu0
        %2075 = vmatprep.mubr.bf16.mxu0 0
        %2076 = vmatmul.mubr.bf16.gmra.mrb[0].mxu0 %v2010
        %v2077 = vpop.f32.mrb[0].mxu0
        %v2078 = vadd.f32 0.0, %v2077
        %v2079 = vpop.f32.mrb[0].mxu0
        %v2080 = vpop.f32.mrb[0].mxu0
        %v2081 = vadd.f32 0.0, %v2080
        %v2082 = vpop.f32.mrb[0].mxu0
        %2083 = vmatprep.mubr.bf16.mxu0 0
        %2084 = vmatmul.mubr.bf16.gmra.mrb[0].mxu0 %v2013
        %v2085 = vpop.f32.mrb[0].mxu0
        %v2086 = vadd.f32 0.0, %v2085
        %v2087 = vpop.f32.mrb[0].mxu0
        %v2088 = vpop.f32.mrb[0].mxu0
        %v2089 = vadd.f32 0.0, %v2088
        %v2090 = vpop.f32.mrb[0].mxu0
        %2091 = vmatprep.mubr.bf16.mxu0 0
        %2092 = vmatmul.mubr.bf16.gmra.mrb[0].mxu0 %v2016
        %v2093 = vpop.f32.mrb[0].mxu0
        %v2094 = vadd.f32 0.0, %v2093
        %v2095 = vpop.f32.mrb[0].mxu0
        %v2096 = vpop.f32.mrb[0].mxu0
        %v2097 = vadd.f32 0.0, %v2096
        %v2098 = vpop.f32.mrb[0].mxu0
        %2099 = vmatprep.mubr.bf16.mxu0 0
        %2100 = vmatmul.mubr.bf16.gmra.mrb[0].mxu0 %v2019
        %v2101 = vpop.f32.mrb[0].mxu0
        %v2102 = vadd.f32 0.0, %v2101
        %v2103 = vpop.f32.mrb[0].mxu0
        %v2104 = vpop.f32.mrb[0].mxu0
        %v2105 = vadd.f32 0.0, %v2104
        %v2106 = vpop.f32.mrb[0].mxu0
        %2107 = vmatprep.mubr.bf16.mxu0 0
        %2108 = vmatmul.mubr.bf16.gmra.mrb[0].mxu0 %v2022
        %v2109 = vpop.f32.mrb[0].mxu0
        %v2110 = vadd.f32 0.0, %v2109
        %v2111 = vpop.f32.mrb[0].mxu0
        %v2112 = vpop.f32.mrb[0].mxu0
        %v2113 = vadd.f32 0.0, %v2112
        %v2114 = vpop.f32.mrb[0].mxu0
        %2115 = vmatprep.mubr.bf16.mxu0 0
        %2116 = vmatmul.mubr.bf16.gmra.mrb[0].mxu0 %v2025
        %v2117 = vpop.f32.mrb[0].mxu0
        %v2118 = vadd.f32 0.0, %v2117
        %v2119 = vpop.f32.mrb[0].mxu0
        %v2120 = vpop.f32.mrb[0].mxu0
        %v2121 = vadd.f32 0.0, %v2120
        %v2122 = vpop.f32.mrb[0].mxu0
        %2123 = vdwg.mxu0
        %v2124 = vadd.f32 %v1924, %v2062
        %v2125 = vadd.f32 %v1927, %v2065
        %v2126 = vadd.f32 %v1932, %v2070
        %v2127 = vadd.f32 %v1935, %v2073
        %v2128 = vadd.f32 %v1940, %v2078
        %v2129 = vadd.f32 %v1943, %v2081
        %v2130 = vadd.f32 %v1948, %v2086
        %v2131 = vadd.f32 %v1951, %v2089
        %v2132 = vadd.f32 %v1956, %v2094
        %v2133 = vadd.f32 %v1959, %v2097
        %v2134 = vadd.f32 %v1964, %v2102
        %v2135 = vadd.f32 %v1967, %v2105
        %v2136 = vadd.f32 %v1972, %v2110
        %v2137 = vadd.f32 %v1975, %v2113
        %v2138 = vadd.f32 %v1980, %v2118
        %v2139 = vadd.f32 %v1983, %v2121
        %v2140 = vld [vmem:[%s8] sm:$0x1]
        %v2142 = vlaneseq
        %v2143 = vshrl.u32 %v2142, 7
        %v2144 = vsub.s32 0, %v2143
        %v2145 = vrot.slane %v2140, %v2144
        %v2147 = vadd.f32 %v2124, %v2145
        %v2148 = vadd.f32 %v2125, %v2145
        %v2149 = vadd.f32 %v2126, %v2145
        %v2150 = vadd.f32 %v2127, %v2145
        %v2151 = vadd.f32 %v2128, %v2145
        %v2152 = vadd.f32 %v2129, %v2145
        %v2153 = vadd.f32 %v2130, %v2145
        %v2154 = vadd.f32 %v2131, %v2145
        %v2155 = vadd.f32 %v2132, %v2145
        %v2156 = vadd.f32 %v2133, %v2145
        %v2157 = vadd.f32 %v2134, %v2145
        %v2158 = vadd.f32 %v2135, %v2145
        %v2159 = vadd.f32 %v2136, %v2145
        %v2160 = vadd.f32 %v2137, %v2145
        %v2161 = vadd.f32 %v2138, %v2145
        %v2162 = vadd.f32 %v2139, %v2145
        %v2163 = vsel %vm888, %v2147, 0.0
        %2164 = vadd.xlane.f32.xlu0 %v2163
        %v2165 = vpop.xlane.xlu0 %2164
        %v2166 = vsel %vm888, %v2148, 0.0
        %2167 = vadd.xlane.f32.xlu0 %v2166
        %v2168 = vpop.xlane.xlu0 %2167
        %v2169 = vsel %vm888, %v2149, 0.0
        %2170 = vadd.xlane.f32.xlu0 %v2169
        %v2171 = vpop.xlane.xlu0 %2170
        %v2172 = vsel %vm888, %v2150, 0.0
        %2173 = vadd.xlane.f32.xlu0 %v2172
        %v2174 = vpop.xlane.xlu0 %2173
        %v2175 = vsel %vm888, %v2151, 0.0
        %2176 = vadd.xlane.f32.xlu0 %v2175
        %v2177 = vpop.xlane.xlu0 %2176
        %v2178 = vsel %vm888, %v2152, 0.0
        %2179 = vadd.xlane.f32.xlu0 %v2178
        %v2180 = vpop.xlane.xlu0 %2179
        %v2181 = vsel %vm888, %v2153, 0.0
        %2182 = vadd.xlane.f32.xlu0 %v2181
        %v2183 = vpop.xlane.xlu0 %2182
        %v2184 = vsel %vm888, %v2154, 0.0
        %2185 = vadd.xlane.f32.xlu0 %v2184
        %v2186 = vpop.xlane.xlu0 %2185
        %v2187 = vsel %vm888, %v2155, 0.0
        %2188 = vadd.xlane.f32.xlu0 %v2187
        %v2189 = vpop.xlane.xlu0 %2188
        %v2190 = vsel %vm888, %v2156, 0.0
        %2191 = vadd.xlane.f32.xlu0 %v2190
        %v2192 = vpop.xlane.xlu0 %2191
        %v2193 = vsel %vm888, %v2157, 0.0
        %2194 = vadd.xlane.f32.xlu0 %v2193
        %v2195 = vpop.xlane.xlu0 %2194
        %v2196 = vsel %vm888, %v2158, 0.0
        %2197 = vadd.xlane.f32.xlu0 %v2196
        %v2198 = vpop.xlane.xlu0 %2197
        %v2199 = vsel %vm888, %v2159, 0.0
        %2200 = vadd.xlane.f32.xlu0 %v2199
        %v2201 = vpop.xlane.xlu0 %2200
        %v2202 = vsel %vm888, %v2160, 0.0
        %2203 = vadd.xlane.f32.xlu0 %v2202
        %v2204 = vpop.xlane.xlu0 %2203
        %v2205 = vsel %vm888, %v2161, 0.0
        %2206 = vadd.xlane.f32.xlu0 %v2205
        %v2207 = vpop.xlane.xlu0 %2206
        %v2208 = vsel %vm888, %v2162, 0.0
        %2209 = vadd.xlane.f32.xlu0 %v2208
        %v2210 = vpop.xlane.xlu0 %2209
        %v2211 = vmul.f32 %v2165, %v1368
        %v2212 = vmul.f32 %v2168, %v1368
        %v2213 = vmul.f32 %v2171, %v1368
        %v2214 = vmul.f32 %v2174, %v1368
        %v2215 = vmul.f32 %v2177, %v1368
        %v2216 = vmul.f32 %v2180, %v1368
        %v2217 = vmul.f32 %v2183, %v1368
        %v2218 = vmul.f32 %v2186, %v1368
        %v2219 = vmul.f32 %v2189, %v1368
        %v2220 = vmul.f32 %v2192, %v1368
        %v2221 = vmul.f32 %v2195, %v1368
        %v2222 = vmul.f32 %v2198, %v1368
        %v2223 = vmul.f32 %v2201, %v1368
        %v2224 = vmul.f32 %v2204, %v1368
        %v2225 = vmul.f32 %v2207, %v1368
        %v2226 = vmul.f32 %v2210, %v1368
        %v2227 = vsub.f32 %v2147, %v2211
        %v2228 = vsub.f32 %v2148, %v2212
        %v2229 = vsub.f32 %v2149, %v2213
        %v2230 = vsub.f32 %v2150, %v2214
        %v2231 = vsub.f32 %v2151, %v2215
        %v2232 = vsub.f32 %v2152, %v2216
        %v2233 = vsub.f32 %v2153, %v2217
        %v2234 = vsub.f32 %v2154, %v2218
        %v2235 = vsub.f32 %v2155, %v2219
        %v2236 = vsub.f32 %v2156, %v2220
        %v2237 = vsub.f32 %v2157, %v2221
        %v2238 = vsub.f32 %v2158, %v2222
        %v2239 = vsub.f32 %v2159, %v2223
        %v2240 = vsub.f32 %v2160, %v2224
        %v2241 = vsub.f32 %v2161, %v2225
        %v2242 = vsub.f32 %v2162, %v2226
        %v2243 = vmul.f32 %v2227, %v2227
        %v2244 = vmul.f32 %v2228, %v2228
        %v2245 = vmul.f32 %v2229, %v2229
        %v2246 = vmul.f32 %v2230, %v2230
        %v2247 = vmul.f32 %v2231, %v2231
        %v2248 = vmul.f32 %v2232, %v2232
        %v2249 = vmul.f32 %v2233, %v2233
        %v2250 = vmul.f32 %v2234, %v2234
        %v2251 = vmul.f32 %v2235, %v2235
        %v2252 = vmul.f32 %v2236, %v2236
        %v2253 = vmul.f32 %v2237, %v2237
        %v2254 = vmul.f32 %v2238, %v2238
        %v2255 = vmul.f32 %v2239, %v2239
        %v2256 = vmul.f32 %v2240, %v2240
        %v2257 = vmul.f32 %v2241, %v2241
        %v2258 = vmul.f32 %v2242, %v2242
        %v2259 = vsel %vm888, %v2243, 0.0
        %2260 = vadd.xlane.f32.xlu0 %v2259
        %v2261 = vpop.xlane.xlu0 %2260
        %v2262 = vsel %vm888, %v2244, 0.0
        %2263 = vadd.xlane.f32.xlu0 %v2262
        %v2264 = vpop.xlane.xlu0 %2263
        %v2265 = vsel %vm888, %v2245, 0.0
        %2266 = vadd.xlane.f32.xlu0 %v2265
        %v2267 = vpop.xlane.xlu0 %2266
        %v2268 = vsel %vm888, %v2246, 0.0
        %2269 = vadd.xlane.f32.xlu0 %v2268
        %v2270 = vpop.xlane.xlu0 %2269
        %v2271 = vsel %vm888, %v2247, 0.0
        %2272 = vadd.xlane.f32.xlu0 %v2271
        %v2273 = vpop.xlane.xlu0 %2272
        %v2274 = vsel %vm888, %v2248, 0.0
        %2275 = vadd.xlane.f32.xlu0 %v2274
        %v2276 = vpop.xlane.xlu0 %2275
        %v2277 = vsel %vm888, %v2249, 0.0
        %2278 = vadd.xlane.f32.xlu0 %v2277
        %v2279 = vpop.xlane.xlu0 %2278
        %v2280 = vsel %vm888, %v2250, 0.0
        %2281 = vadd.xlane.f32.xlu0 %v2280
        %v2282 = vpop.xlane.xlu0 %2281
        %v2283 = vsel %vm888, %v2251, 0.0
        %2284 = vadd.xlane.f32.xlu0 %v2283
        %v2285 = vpop.xlane.xlu0 %2284
        %v2286 = vsel %vm888, %v2252, 0.0
        %2287 = vadd.xlane.f32.xlu0 %v2286
        %v2288 = vpop.xlane.xlu0 %2287
        %v2289 = vsel %vm888, %v2253, 0.0
        %2290 = vadd.xlane.f32.xlu0 %v2289
        %v2291 = vpop.xlane.xlu0 %2290
        %v2292 = vsel %vm888, %v2254, 0.0
        %2293 = vadd.xlane.f32.xlu0 %v2292
        %v2294 = vpop.xlane.xlu0 %2293
        %v2295 = vsel %vm888, %v2255, 0.0
        %2296 = vadd.xlane.f32.xlu0 %v2295
        %v2297 = vpop.xlane.xlu0 %2296
        %v2298 = vsel %vm888, %v2256, 0.0
        %2299 = vadd.xlane.f32.xlu0 %v2298
        %v2300 = vpop.xlane.xlu0 %2299
        %v2301 = vsel %vm888, %v2257, 0.0
        %2302 = vadd.xlane.f32.xlu0 %v2301
        %v2303 = vpop.xlane.xlu0 %2302
        %v2304 = vsel %vm888, %v2258, 0.0
        %2305 = vadd.xlane.f32.xlu0 %v2304
        %v2306 = vpop.xlane.xlu0 %2305
        %v2307 = vmul.f32 %v2261, %v1368
        %v2308 = vmul.f32 %v2264, %v1368
        %v2309 = vmul.f32 %v2267, %v1368
        %v2310 = vmul.f32 %v2270, %v1368
        %v2311 = vmul.f32 %v2273, %v1368
        %v2312 = vmul.f32 %v2276, %v1368
        %v2313 = vmul.f32 %v2279, %v1368
        %v2314 = vmul.f32 %v2282, %v1368
        %v2315 = vmul.f32 %v2285, %v1368
        %v2316 = vmul.f32 %v2288, %v1368
        %v2317 = vmul.f32 %v2291, %v1368
        %v2318 = vmul.f32 %v2294, %v1368
        %v2319 = vmul.f32 %v2297, %v1368
        %v2320 = vmul.f32 %v2300, %v1368
        %v2321 = vmul.f32 %v2303, %v1368
        %v2322 = vmul.f32 %v2306, %v1368
        %v2323 = vadd.f32 %v2307, 1e-05
        %v2324 = vadd.f32 %v2308, 1e-05
        %v2325 = vadd.f32 %v2309, 1e-05
        %v2326 = vadd.f32 %v2310, 1e-05
        %v2327 = vadd.f32 %v2311, 1e-05
        %v2328 = vadd.f32 %v2312, 1e-05
        %v2329 = vadd.f32 %v2313, 1e-05
        %v2330 = vadd.f32 %v2314, 1e-05
        %v2331 = vadd.f32 %v2315, 1e-05
        %v2332 = vadd.f32 %v2316, 1e-05
        %v2333 = vadd.f32 %v2317, 1e-05
        %v2334 = vadd.f32 %v2318, 1e-05
        %v2335 = vadd.f32 %v2319, 1e-05
        %v2336 = vadd.f32 %v2320, 1e-05
        %v2337 = vadd.f32 %v2321, 1e-05
        %v2338 = vadd.f32 %v2322, 1e-05
        %v2339 = vrsqrt.pop %v2323
        %v2340 = vrsqrt.pop %v2324
        %v2341 = vrsqrt.pop %v2325
        %v2342 = vrsqrt.pop %v2326
        %v2343 = vrsqrt.pop %v2327
        %v2344 = vrsqrt.pop %v2328
        %v2345 = vrsqrt.pop %v2329
        %v2346 = vrsqrt.pop %v2330
        %v2347 = vrsqrt.pop %v2331
        %v2348 = vrsqrt.pop %v2332
        %v2349 = vrsqrt.pop %v2333
        %v2350 = vrsqrt.pop %v2334
        %v2351 = vrsqrt.pop %v2335
        %v2352 = vrsqrt.pop %v2336
        %v2353 = vrsqrt.pop %v2337
        %v2354 = vrsqrt.pop %v2338
        %v2355 = vmul.f32 %v2227, %v2339
        %v2356 = vmul.f32 %v2228, %v2340
        %v2357 = vmul.f32 %v2229, %v2341
        %v2358 = vmul.f32 %v2230, %v2342
        %v2359 = vmul.f32 %v2231, %v2343
        %v2360 = vmul.f32 %v2232, %v2344
        %v2361 = vmul.f32 %v2233, %v2345
        %v2362 = vmul.f32 %v2234, %v2346
        %v2363 = vmul.f32 %v2235, %v2347
        %v2364 = vmul.f32 %v2236, %v2348
        %v2365 = vmul.f32 %v2237, %v2349
        %v2366 = vmul.f32 %v2238, %v2350
        %v2367 = vmul.f32 %v2239, %v2351
        %v2368 = vmul.f32 %v2240, %v2352
        %v2369 = vmul.f32 %v2241, %v2353
        %v2370 = vmul.f32 %v2242, %v2354
        %v2371 = vld [vmem:[%s9] sm:$0x1]
        %v2373 = vlaneseq
        %v2374 = vshrl.u32 %v2373, 7
        %v2375 = vsub.s32 0, %v2374
        %v2376 = vrot.slane %v2371, %v2375
        %v2378 = vmul.f32 %v2355, %v2376
        %v2379 = vmul.f32 %v2356, %v2376
        %v2380 = vmul.f32 %v2357, %v2376
        %v2381 = vmul.f32 %v2358, %v2376
        %v2382 = vmul.f32 %v2359, %v2376
        %v2383 = vmul.f32 %v2360, %v2376
        %v2384 = vmul.f32 %v2361, %v2376
        %v2385 = vmul.f32 %v2362, %v2376
        %v2386 = vmul.f32 %v2363, %v2376
        %v2387 = vmul.f32 %v2364, %v2376
        %v2388 = vmul.f32 %v2365, %v2376
        %v2389 = vmul.f32 %v2366, %v2376
        %v2390 = vmul.f32 %v2367, %v2376
        %v2391 = vmul.f32 %v2368, %v2376
        %v2392 = vmul.f32 %v2369, %v2376
        %v2393 = vmul.f32 %v2370, %v2376
        %v2394 = vld [vmem:[%s10] sm:$0x1]
        %v2396 = vlaneseq
        %v2397 = vshrl.u32 %v2396, 7
        %v2398 = vsub.s32 0, %v2397
        %v2399 = vrot.slane %v2394, %v2398
        %v2401 = vadd.f32 %v2378, %v2399
        %v2402 = vadd.f32 %v2379, %v2399
        %v2403 = vadd.f32 %v2380, %v2399
        %v2404 = vadd.f32 %v2381, %v2399
        %v2405 = vadd.f32 %v2382, %v2399
        %v2406 = vadd.f32 %v2383, %v2399
        %v2407 = vadd.f32 %v2384, %v2399
        %v2408 = vadd.f32 %v2385, %v2399
        %v2409 = vadd.f32 %v2386, %v2399
        %v2410 = vadd.f32 %v2387, %v2399
        %v2411 = vadd.f32 %v2388, %v2399
        %v2412 = vadd.f32 %v2389, %v2399
        %v2413 = vadd.f32 %v2390, %v2399
        %v2414 = vadd.f32 %v2391, %v2399
        %v2415 = vadd.f32 %v2392, %v2399
        %v2416 = vadd.f32 %v2393, %v2399
        %v2417 = vmax.f32 %v2401, 0.0
        %v2418 = vmax.f32 %v2402, 0.0
        %v2419 = vmax.f32 %v2403, 0.0
        %v2420 = vmax.f32 %v2404, 0.0
        %v2421 = vmax.f32 %v2405, 0.0
        %v2422 = vmax.f32 %v2406, 0.0
        %v2423 = vmax.f32 %v2407, 0.0
        %v2424 = vmax.f32 %v2408, 0.0
        %v2425 = vmax.f32 %v2409, 0.0
        %v2426 = vmax.f32 %v2410, 0.0
        %v2427 = vmax.f32 %v2411, 0.0
        %v2428 = vmax.f32 %v2412, 0.0
        %v2429 = vmax.f32 %v2413, 0.0
        %v2430 = vmax.f32 %v2414, 0.0
        %v2431 = vmax.f32 %v2415, 0.0
        %v2432 = vmax.f32 %v2416, 0.0
        %v2433 = vld [vmem:[%s11] sm:$0x1]
        %v2435 = vlaneseq
        %v2436 = vshrl.u32 %v2435, 7
        %v2437 = vsub.s32 0, %v2436
        %v2438 = vrot.slane %v2433, %v2437
        %v2440 = vmul.f32 %v2417, %v2438
        %v2441 = vmul.f32 %v2418, %v2438
        %v2442 = vmul.f32 %v2419, %v2438
        %v2443 = vmul.f32 %v2420, %v2438
        %v2444 = vmul.f32 %v2421, %v2438
        %v2445 = vmul.f32 %v2422, %v2438
        %v2446 = vmul.f32 %v2423, %v2438
        %v2447 = vmul.f32 %v2424, %v2438
        %v2448 = vmul.f32 %v2425, %v2438
        %v2449 = vmul.f32 %v2426, %v2438
        %v2450 = vmul.f32 %v2427, %v2438
        %v2451 = vmul.f32 %v2428, %v2438
        %v2452 = vmul.f32 %v2429, %v2438
        %v2453 = vmul.f32 %v2430, %v2438
        %v2454 = vmul.f32 %v2431, %v2438
        %v2455 = vmul.f32 %v2432, %v2438
        %v2456 = vsel %vm888, %v2440, 0.0
        %2457 = vadd.xlane.f32.xlu0 %v2456
        %v2458 = vpop.xlane.xlu0 %2457
        %v2459 = vsel %vm888, %v2441, 0.0
        %2460 = vadd.xlane.f32.xlu0 %v2459
        %v2461 = vpop.xlane.xlu0 %2460
        %v2462 = vsel %vm888, %v2442, 0.0
        %2463 = vadd.xlane.f32.xlu0 %v2462
        %v2464 = vpop.xlane.xlu0 %2463
        %v2465 = vsel %vm888, %v2443, 0.0
        %2466 = vadd.xlane.f32.xlu0 %v2465
        %v2467 = vpop.xlane.xlu0 %2466
        %v2468 = vsel %vm888, %v2444, 0.0
        %2469 = vadd.xlane.f32.xlu0 %v2468
        %v2470 = vpop.xlane.xlu0 %2469
        %v2471 = vsel %vm888, %v2445, 0.0
        %2472 = vadd.xlane.f32.xlu0 %v2471
        %v2473 = vpop.xlane.xlu0 %2472
        %v2474 = vsel %vm888, %v2446, 0.0
        %2475 = vadd.xlane.f32.xlu0 %v2474
        %v2476 = vpop.xlane.xlu0 %2475
        %v2477 = vsel %vm888, %v2447, 0.0
        %2478 = vadd.xlane.f32.xlu0 %v2477
        %v2479 = vpop.xlane.xlu0 %2478
        %v2480 = vsel %vm888, %v2448, 0.0
        %2481 = vadd.xlane.f32.xlu0 %v2480
        %v2482 = vpop.xlane.xlu0 %2481
        %v2483 = vsel %vm888, %v2449, 0.0
        %2484 = vadd.xlane.f32.xlu0 %v2483
        %v2485 = vpop.xlane.xlu0 %2484
        %v2486 = vsel %vm888, %v2450, 0.0
        %2487 = vadd.xlane.f32.xlu0 %v2486
        %v2488 = vpop.xlane.xlu0 %2487
        %v2489 = vsel %vm888, %v2451, 0.0
        %2490 = vadd.xlane.f32.xlu0 %v2489
        %v2491 = vpop.xlane.xlu0 %2490
        %v2492 = vsel %vm888, %v2452, 0.0
        %2493 = vadd.xlane.f32.xlu0 %v2492
        %v2494 = vpop.xlane.xlu0 %2493
        %v2495 = vsel %vm888, %v2453, 0.0
        %2496 = vadd.xlane.f32.xlu0 %v2495
        %v2497 = vpop.xlane.xlu0 %2496
        %v2498 = vsel %vm888, %v2454, 0.0
        %2499 = vadd.xlane.f32.xlu0 %v2498
        %v2500 = vpop.xlane.xlu0 %2499
        %v2501 = vsel %vm888, %v2455, 0.0
        %2502 = vadd.xlane.f32.xlu0 %v2501
        %v2503 = vpop.xlane.xlu0 %2502
        %v2504 = vld [vmem:[#allocation2] sm:$0x1]
        %v2506 = vlaneseq
        %v2507 = vshrl.u32 %v2506, 7
        %v2508 = vsub.s32 0, %v2507
        %v2509 = vrot.slane %v2504, %v2508
        %v2511 = vadd.f32 %v2458, %v2509
        %v2512 = vadd.f32 %v2461, %v2509
        %v2513 = vadd.f32 %v2464, %v2509
        %v2514 = vadd.f32 %v2467, %v2509
        %v2515 = vadd.f32 %v2470, %v2509
        %v2516 = vadd.f32 %v2473, %v2509
        %v2517 = vadd.f32 %v2476, %v2509
        %v2518 = vadd.f32 %v2479, %v2509
        %v2519 = vadd.f32 %v2482, %v2509
        %v2520 = vadd.f32 %v2485, %v2509
        %v2521 = vadd.f32 %v2488, %v2509
        %v2522 = vadd.f32 %v2491, %v2509
        %v2523 = vadd.f32 %v2494, %v2509
        %v2524 = vadd.f32 %v2497, %v2509
        %v2525 = vadd.f32 %v2500, %v2509
        %v2526 = vadd.f32 %v2503, %v2509
        %2527 = vxpose.xlu0.b32.start [1/16] %v2511, 128
        %2528 = vxpose.xlu0.b32.cont [2/16] %v2512, 128
        %2529 = vxpose.xlu0.b32.cont [3/16] %v2513, 128
        %2530 = vxpose.xlu0.b32.cont [4/16] %v2514, 128
        %2531 = vxpose.xlu0.b32.cont [5/16] %v2515, 128
        %2532 = vxpose.xlu0.b32.cont [6/16] %v2516, 128
        %2533 = vxpose.xlu0.b32.cont [7/16] %v2517, 128
        %2534 = vxpose.xlu0.b32.cont [8/16] %v2518, 128
        %2535 = vxpose.xlu0.b32.cont [9/16] %v2519, 128
        %2536 = vxpose.xlu0.b32.cont [10/16] %v2520, 128
        %2537 = vxpose.xlu0.b32.cont [11/16] %v2521, 128
        %2538 = vxpose.xlu0.b32.cont [12/16] %v2522, 128
        %2539 = vxpose.xlu0.b32.cont [13/16] %v2523, 128
        %2540 = vxpose.xlu0.b32.cont [14/16] %v2524, 128
        %2541 = vxpose.xlu0.b32.cont [15/16] %v2525, 128
        %2542 = vxpose.xlu0.b32.end [16/16] %v2526, 128
        %v2543 = vpop.trf.xlu0
        %v2544 = vpop.trf.xlu0
        %v2545 = vpop.trf.xlu0
        %v2546 = vpop.trf.xlu0
        %v2547 = vpop.trf.xlu0
        %v2548 = vpop.trf.xlu0
        %v2549 = vpop.trf.xlu0
        %v2550 = vpop.trf.xlu0
        %v2551 = vpop.trf.xlu0
        %v2552 = vpop.trf.xlu0
        %v2553 = vpop.trf.xlu0
        %v2554 = vpop.trf.xlu0
        %v2555 = vpop.trf.xlu0
        %v2556 = vpop.trf.xlu0
        %v2557 = vpop.trf.xlu0
        %v2558 = vpop.trf.xlu0
        %v2559 = vmax.f32 %v2543, 0.0
        %2560 = vst [vmem:[%s467] sm:$0x1] %v2559
        %s2561 = sand.u32 %s325, 1
        %s2562 = scalar_lea.sflag [#allocation4], %s2561
        %s2563 = sand.u32 %s325, 1
        %s2564 = scalar_lea.vmem [#allocation3], %s2563
        // Predicated region
        $region73: #{tpu_custom_call.1} parent=71 // pred_check
          %p2565 = pneg %p335
        $region74: #{tpu_custom_call.1} parent=71 // pred_check_branch
          %2567 = sbr.rel (%p2565) target = $region76
        $region75: #{tpu_custom_call.1} parent=71 // pred_region
          %s2569 = ssub.s32 16, 16
          %2570 = vsyncadd %s2562, %s2569
          %s2571 = smul.addr %s29, 16
          %s2572 = scalar_lea.hbm %s13, %s2571
          %s2574 = sshll.u32 %s2564, 4
          %s2575 = int_to_ptr.vmem [resolvable:$true] %s2574
          %2577 = dma.vmem_to_hbm [thread:$0]  %s2575, 16, %s2572, %s2562
        $region76: #{tpu_custom_call.1} parent=71 // pred_fallthru
          _
      $region72: #{tpu_custom_call.1} parent=5 // pred_fallthru
        _
      %p2578 = scmp.le.s32.totalorder 2, %s24
      // Predicated region
      $region77: #{tpu_custom_call.1} parent=5 // pred_check
        %p2579 = pneg %p2578
      $region78: #{tpu_custom_call.1} parent=5 // pred_check_branch
        %2581 = sbr.rel (%p2579) target = $region80
      $region79: #{tpu_custom_call.1} parent=5 // pred_region
        %s2582 = ssub.s32 %s24, 2
        // Predicated region
        $region81: #{tpu_custom_call.1} parent=79 // pred_check
          %p2583 = pneg %p341
        $region82: #{tpu_custom_call.1} parent=79 // pred_check_branch
          %2585 = sbr.rel (%p2583) target = $region84
        $region83: #{tpu_custom_call.1} parent=79 // pred_region
          %s2586 = sand.u32 %s326, 1
          %s2587 = scalar_lea.sflag [#allocation4], %s2586
          %s2588 = sand.u32 %s326, 1
          %s2589 = scalar_lea.vmem [#allocation3], %s2588
          %2590 = dma.done %s2587, 16
        $region84: #{tpu_custom_call.1} parent=79 // pred_fallthru
          _
      $region80: #{tpu_custom_call.1} parent=5 // pred_fallthru
        _
    $region6: #{tpu_custom_call.1} parent=1 // loop_footer
      %s28 = sadd.s32 1, %s24
    $region7: #{tpu_custom_call.1} parent=1 // loop_footer_branch
      %23 = sbr.rel target = $region3
    $region8: #{tpu_custom_call.1} parent=1 // loop_exit
      _
    %2591 = vsyncpa [#allocation4], 1
    %s2592 = scalar_lea.sflag [#allocation4], 1
    %2593 = vsyncpa %s2592, 1

</llo_original>
